<compile_context>
chip_gen: v7x
topology: tpu7x:2x2x1
jax: 0.10.0
libtpu: 0.0.40
codegen_flags: <defaults>
</compile_context>

<pallas_src>
import jax
import jax.numpy as jnp
from jax import lax
from jax.experimental import pallas as pl
from jax.experimental.pallas import tpu as pltpu


def _large_field_upsample_kernel(x_ref, wc_ref, bc_ref, out_ref):
    # x_ref  : (1, H+12, W+12, Ca)  zero-padded NHWC input with an appended ones-channel
    # wc_ref : (9*Ca, 4*Cout)       fused (1x1 -> dilated 3x3 -> transpose-conv) weights
    # bc_ref : (1, 4*Cout)          fused bias, columns ordered (dh, dw, co)
    # out_ref: (1, H*W, 4*Cout)     columns ordered (dh, dw, co)
    H = x_ref.shape[1] - 12
    W = x_ref.shape[2] - 12
    Ca = x_ref.shape[3]

    # im2col of the 9 dilated taps (dilation 6) -> (H*W, 9*Ca)
    cols = []
    for kh in range(3):
        for kw in range(3):
            win = x_ref[0, kh * 6:kh * 6 + H, kw * 6:kw * 6 + W, :]
            cols.append(win.reshape(H * W, Ca))
    slab = jnp.concatenate(cols, axis=-1)

    # single fused matmul + bias + ReLU, one lane-dense store
    y = jnp.dot(slab, wc_ref[...], preferred_element_type=jnp.float32)
    y = jnp.maximum(y + bc_ref[...], 0.0)
    out_ref[0] = y.astype(out_ref.dtype)


def large_field_upsample(x_nchw, params):
    """Forward pass of LargeFieldUpSample. x_nchw: (N, Cin, H, W) -> (N, Cout, 2H, 2W)."""
    w1, b1, w2, b2, wt, bt = params          # PyTorch-shaped parameters
    N, Cin, H, W = x_nchw.shape
    Cmid = w1.shape[0]                       # = out_channels
    Cout = wt.shape[1]                       # = out_channels
    Ca = Cin + 1                             # x channels + constant-1 channel

    # ---- fold the three linear stages into one weight / bias (tiny, computed once by XLA) ----
    W1_aug = jnp.concatenate(
        [jnp.transpose(w1[:, :, 0, 0], (1, 0)), b1.reshape(1, Cmid)], axis=0
    ).astype(jnp.float32)                                              # (Ca, Cmid)
    W2_k = jnp.transpose(w2, (2, 3, 1, 0)).astype(jnp.float32)         # (3, 3, ci, co)
    Wt_all = jnp.transpose(wt, (0, 2, 3, 1)).reshape(Cmid, 4 * Cout)   # (Cmid, 4*Cout)
    Wt_all = Wt_all.astype(jnp.float32)
    Wc = jnp.einsum('ac,hwcm,mo->hwao', W1_aug, W2_k, Wt_all,
                    precision=lax.Precision.HIGHEST)                   # (3, 3, Ca, 4*Cout)
    Wc = Wc.reshape(9 * Ca, 4 * Cout)
    bc = (jnp.einsum('m,mo->o', b2.astype(jnp.float32), Wt_all,
                     precision=lax.Precision.HIGHEST)
          + jnp.tile(bt.astype(jnp.float32), 4)).reshape(1, 4 * Cout)

    # ---- layout glue: NHWC, append ones channel (carries b1 through the zero pad), pad ----
    x_nhwc = jnp.transpose(x_nchw, (0, 2, 3, 1)).astype(jnp.float32)
    x_aug = jnp.concatenate([x_nhwc, jnp.ones((N, H, W, 1), jnp.float32)], axis=-1)
    x_pad = jnp.pad(x_aug, ((0, 0), (6, 6), (6, 6), (0, 0)))           # (N, H+12, W+12, Ca)

    out = pl.pallas_call(
        _large_field_upsample_kernel,
        out_shape=jax.ShapeDtypeStruct((N, H * W, 4 * Cout), jnp.float32),
        grid_spec=pltpu.PrefetchScalarGridSpec(
            num_scalar_prefetch=0,
            grid=(N,),
            in_specs=[
                pl.BlockSpec((1, H + 12, W + 12, Ca), lambda n: (n, 0, 0, 0)),
                pl.BlockSpec((9 * Ca, 4 * Cout), lambda n: (0, 0)),
                pl.BlockSpec((1, 4 * Cout), lambda n: (0, 0)),
            ],
            out_specs=pl.BlockSpec((1, H * W, 4 * Cout), lambda n: (n, 0, 0)),
        ),
        compiler_params=pltpu.CompilerParams(dimension_semantics=("parallel",)),
    )(x_pad, Wc, bc)

    # glue: interleave the 2x2 transpose-conv taps and go back to NCHW
    out = out.reshape(N, H, W, 2, 2, Cout)                 # (n, h, w, dh, dw, co)
    out = jnp.transpose(out, (0, 5, 1, 3, 2, 4))           # (n, co, h, dh, w, dw)
    return out.reshape(N, Cout, 2 * H, 2 * W)


def reference(x_nchw, params):
    """Pure-JAX reference matching PyTorch semantics, for validation."""
    w1, b1, w2, b2, wt, bt = params
    x = jnp.transpose(x_nchw, (0, 2, 3, 1))                            # NHWC
    y1 = jnp.einsum('nhwi,oi->nhwo', x, w1[:, :, 0, 0],
                    precision=lax.Precision.HIGHEST) + b1
    y2 = lax.conv_general_dilated(
        y1, jnp.transpose(w2, (2, 3, 1, 0)),
        window_strides=(1, 1), padding=((6, 6), (6, 6)), rhs_dilation=(6, 6),
        dimension_numbers=('NHWC', 'HWIO', 'NHWC'),
        precision=lax.Precision.HIGHEST) + b2
    N, H, W, Cmid = y2.shape
    Cout = wt.shape[1]
    # ConvTranspose2d(k=2, s=2): out[n, 2h+dh, 2w+dw, o] = sum_i y2[n,h,w,i] * wt[i,o,dh,dw]
    e = jnp.einsum('nhwi,iocd->nhcwdo', y2, wt, precision=lax.Precision.HIGHEST)
    y3 = e.reshape(N, 2 * H, 2 * W, Cout) + bt
    y3 = jnp.maximum(y3, 0.0)
    return jnp.transpose(y3, (0, 3, 1, 2))                             # NCHW


if __name__ == "__main__":
    key = jax.random.PRNGKey(0)
    N, Cin, H, W = 2, 4, 16, 16      # small example shapes
    Cout = 8                         # out_channels

    ks = jax.random.split(key, 7)
    x = jax.random.normal(ks[0], (N, Cin, H, W), jnp.float32)
    # deterministic synthetic parameters (PyTorch shapes)
    w1 = jax.random.normal(ks[1], (Cout, Cin, 1, 1), jnp.float32) * 0.5
    b1 = jax.random.normal(ks[2], (Cout,), jnp.float32) * 0.1
    w2 = jax.random.normal(ks[3], (Cout, Cout, 3, 3), jnp.float32) * 0.2
    b2 = jax.random.normal(ks[4], (Cout,), jnp.float32) * 0.1
    wt = jax.random.normal(ks[5], (Cout, Cout, 2, 2), jnp.float32) * 0.3
    bt = jax.random.normal(ks[6], (Cout,), jnp.float32) * 0.1
    params = (w1, b1, w2, b2, wt, bt)

    out = large_field_upsample(x, params)
    out = jax.block_until_ready(out)

    assert out.shape == (N, Cout, 2 * H, 2 * W), out.shape
    ref = reference(x, params)
    err = float(jnp.max(jnp.abs(out - ref)))
    if err > 1e-3:
        raise AssertionError(f"mismatch vs reference: max abs err {err}")
    print("KERNEL_OK")
</pallas_src>

<mosaic_0001>
module attributes {stable_mosaic.version = 11 : i64} {
  func.func @_large_field_upsample_kernel(%arg0: i32, %arg1: memref<1x28x28x5xf32, #tpu.memory_space<vmem>>, %arg2: memref<45x32xf32, #tpu.memory_space<vmem>>, %arg3: memref<1x32xf32, #tpu.memory_space<vmem>>, %arg4: memref<1x256x32xf32, #tpu.memory_space<vmem>>) attributes {dimension_semantics = [#tpu.dimension_semantics<parallel>], iteration_bounds = array<i64: 2>, scalar_prefetch = 0 : i64, scratch_operands = 0 : i64, tpu.core_type = #tpu.core_type<tc>, window_params = [{transform_indices = @transform_0, window_bounds = array<i64: 1, 28, 28, 5>}, {pipeline_mode = #tpu.pipeline_mode<synchronous>, transform_indices = @transform_1, window_bounds = array<i64: 45, 32>}, {pipeline_mode = #tpu.pipeline_mode<synchronous>, transform_indices = @transform_2, window_bounds = array<i64: 1, 32>}, {transform_indices = @transform_3, window_bounds = array<i64: 1, 256, 32>}]} {
    %c0 = arith.constant 0 : index
    %c0_0 = arith.constant 0 : index
    %c0_1 = arith.constant 0 : index
    %c0_2 = arith.constant 0 : index
    %0 = vector.load %arg1[%c0, %c0_0, %c0_1, %c0_2] : memref<1x28x28x5xf32, #tpu.memory_space<vmem>>, vector<1x16x16x5xf32>
    %1 = vector.shape_cast %0 : vector<1x16x16x5xf32> to vector<16x16x5xf32>
    %2 = vector.shape_cast %1 : vector<16x16x5xf32> to vector<256x5xf32>
    %c0_3 = arith.constant 0 : index
    %c0_4 = arith.constant 0 : index
    %c6 = arith.constant 6 : index
    %c0_5 = arith.constant 0 : index
    %3 = vector.load %arg1[%c0_3, %c0_4, %c6, %c0_5] : memref<1x28x28x5xf32, #tpu.memory_space<vmem>>, vector<1x16x16x5xf32>
    %4 = vector.shape_cast %3 : vector<1x16x16x5xf32> to vector<16x16x5xf32>
    %5 = vector.shape_cast %4 : vector<16x16x5xf32> to vector<256x5xf32>
    %c0_6 = arith.constant 0 : index
    %c0_7 = arith.constant 0 : index
    %c12 = arith.constant 12 : index
    %c0_8 = arith.constant 0 : index
    %6 = vector.load %arg1[%c0_6, %c0_7, %c12, %c0_8] : memref<1x28x28x5xf32, #tpu.memory_space<vmem>>, vector<1x16x16x5xf32>
    %7 = vector.shape_cast %6 : vector<1x16x16x5xf32> to vector<16x16x5xf32>
    %8 = vector.shape_cast %7 : vector<16x16x5xf32> to vector<256x5xf32>
    %c0_9 = arith.constant 0 : index
    %c6_10 = arith.constant 6 : index
    %c0_11 = arith.constant 0 : index
    %c0_12 = arith.constant 0 : index
    %9 = vector.load %arg1[%c0_9, %c6_10, %c0_11, %c0_12] : memref<1x28x28x5xf32, #tpu.memory_space<vmem>>, vector<1x16x16x5xf32>
    %10 = vector.shape_cast %9 : vector<1x16x16x5xf32> to vector<16x16x5xf32>
    %11 = vector.shape_cast %10 : vector<16x16x5xf32> to vector<256x5xf32>
    %c0_13 = arith.constant 0 : index
    %c6_14 = arith.constant 6 : index
    %c6_15 = arith.constant 6 : index
    %c0_16 = arith.constant 0 : index
    %12 = vector.load %arg1[%c0_13, %c6_14, %c6_15, %c0_16] : memref<1x28x28x5xf32, #tpu.memory_space<vmem>>, vector<1x16x16x5xf32>
    %13 = vector.shape_cast %12 : vector<1x16x16x5xf32> to vector<16x16x5xf32>
    %14 = vector.shape_cast %13 : vector<16x16x5xf32> to vector<256x5xf32>
    %c0_17 = arith.constant 0 : index
    %c6_18 = arith.constant 6 : index
    %c12_19 = arith.constant 12 : index
    %c0_20 = arith.constant 0 : index
    %15 = vector.load %arg1[%c0_17, %c6_18, %c12_19, %c0_20] : memref<1x28x28x5xf32, #tpu.memory_space<vmem>>, vector<1x16x16x5xf32>
    %16 = vector.shape_cast %15 : vector<1x16x16x5xf32> to vector<16x16x5xf32>
    %17 = vector.shape_cast %16 : vector<16x16x5xf32> to vector<256x5xf32>
    %c0_21 = arith.constant 0 : index
    %c12_22 = arith.constant 12 : index
    %c0_23 = arith.constant 0 : index
    %c0_24 = arith.constant 0 : index
    %18 = vector.load %arg1[%c0_21, %c12_22, %c0_23, %c0_24] : memref<1x28x28x5xf32, #tpu.memory_space<vmem>>, vector<1x16x16x5xf32>
    %19 = vector.shape_cast %18 : vector<1x16x16x5xf32> to vector<16x16x5xf32>
    %20 = vector.shape_cast %19 : vector<16x16x5xf32> to vector<256x5xf32>
    %c0_25 = arith.constant 0 : index
    %c12_26 = arith.constant 12 : index
    %c6_27 = arith.constant 6 : index
    %c0_28 = arith.constant 0 : index
    %21 = vector.load %arg1[%c0_25, %c12_26, %c6_27, %c0_28] : memref<1x28x28x5xf32, #tpu.memory_space<vmem>>, vector<1x16x16x5xf32>
    %22 = vector.shape_cast %21 : vector<1x16x16x5xf32> to vector<16x16x5xf32>
    %23 = vector.shape_cast %22 : vector<16x16x5xf32> to vector<256x5xf32>
    %c0_29 = arith.constant 0 : index
    %c12_30 = arith.constant 12 : index
    %c12_31 = arith.constant 12 : index
    %c0_32 = arith.constant 0 : index
    %24 = vector.load %arg1[%c0_29, %c12_30, %c12_31, %c0_32] : memref<1x28x28x5xf32, #tpu.memory_space<vmem>>, vector<1x16x16x5xf32>
    %25 = vector.shape_cast %24 : vector<1x16x16x5xf32> to vector<16x16x5xf32>
    %26 = vector.shape_cast %25 : vector<16x16x5xf32> to vector<256x5xf32>
    %27 = tpu.concatenate %2, %5, %8, %11, %14, %17, %20, %23, %26 in 1 : vector<256x5xf32>, vector<256x5xf32>, vector<256x5xf32>, vector<256x5xf32>, vector<256x5xf32>, vector<256x5xf32>, vector<256x5xf32>, vector<256x5xf32>, vector<256x5xf32> -> vector<256x45xf32>
    %c0_33 = arith.constant 0 : index
    %c0_34 = arith.constant 0 : index
    %28 = vector.load %arg2[%c0_33, %c0_34] : memref<45x32xf32, #tpu.memory_space<vmem>>, vector<45x32xf32>
    %cst = arith.constant dense<0.000000e+00> : vector<256x32xf32>
    %29 = tpu.matmul %27, %28, %cst {dimension_numbers = #tpu.dot_dimension_numbers<[1], [0], [0], [1], [0, 0, 1, 1], [], []>} : vector<256x45xf32>, vector<45x32xf32>, vector<256x32xf32> -> vector<256x32xf32>
    %c0_35 = arith.constant 0 : index
    %c0_36 = arith.constant 0 : index
    %30 = vector.load %arg3[%c0_35, %c0_36] : memref<1x32xf32, #tpu.memory_space<vmem>>, vector<1x32xf32>
    %31 = vector.broadcast %30 : vector<1x32xf32> to vector<256x32xf32>
    %32 = arith.addf %29, %31 : vector<256x32xf32>
    %cst_37 = arith.constant 0.000000e+00 : f32
    %33 = vector.broadcast %cst_37 : f32 to vector<256x32xf32>
    %34 = arith.maximumf %32, %33 : vector<256x32xf32>
    %c0_38 = arith.constant 0 : index
    %c0_39 = arith.constant 0 : index
    %c0_40 = arith.constant 0 : index
    %35 = vector.load %arg4[%c0_38, %c0_39, %c0_40] : memref<1x256x32xf32, #tpu.memory_space<vmem>>, vector<1x256x32xf32>
    %36 = vector.shape_cast %35 : vector<1x256x32xf32> to vector<256x32xf32>
    %37 = vector.shape_cast %34 : vector<256x32xf32> to vector<1x256x32xf32>
    tpu.vector_store %arg4[%c0_38, %c0_39, %c0_40], %37 {strides = array<i32>} : memref<1x256x32xf32, #tpu.memory_space<vmem>>, vector<1x256x32xf32>,
    return
  }
  func.func @transform_0(%arg0: i32) -> (i32, i32, i32, i32) {
    %c0_i32 = arith.constant 0 : i32
    %c0_i32_0 = arith.constant 0 : i32
    %c0_i32_1 = arith.constant 0 : i32
    %c0_i32_2 = arith.constant 0 : i32
    return %arg0, %c0_i32, %c0_i32_0, %c0_i32_1 : i32, i32, i32, i32
  }
  func.func @transform_1(%arg0: i32) -> (i32, i32) {
    %c0_i32 = arith.constant 0 : i32
    %c0_i32_0 = arith.constant 0 : i32
    %c0_i32_1 = arith.constant 0 : i32
    return %c0_i32, %c0_i32_0 : i32, i32
  }
  func.func @transform_2(%arg0: i32) -> (i32, i32) {
    %c0_i32 = arith.constant 0 : i32
    %c0_i32_0 = arith.constant 0 : i32
    %c0_i32_1 = arith.constant 0 : i32
    return %c0_i32, %c0_i32_0 : i32, i32
  }
  func.func @transform_3(%arg0: i32) -> (i32, i32, i32) {
    %c0_i32 = arith.constant 0 : i32
    %c0_i32_0 = arith.constant 0 : i32
    %c0_i32_1 = arith.constant 0 : i32
    return %arg0, %c0_i32, %c0_i32_0 : i32, i32, i32
  }
}

</mosaic_0001>

<llo_original>
// kernel: tpu_custom_call.1
$region0: #{tpu_custom_call.1}
  #allocation0 [shape = 'u32[]', space=smem, size = 0x4, offset = 0x4, fixed_abs, tag = 'smem constant byte address 0x4 - core index']
  #allocation1 [shape = 'u32[144,128]{1,0:T(1,128)}', space=vmem, size = 0x12000, scoped, tag = 'internal scratch']
  %s0 = inlined_call_operand.vmem [shape: f32[2,28,28,5], index: 0, kind: input, shape index: {}]
  %s1 = inlined_call_operand.vmem [shape: f32[45,32], index: 1, kind: input, shape index: {}]
  %s2 = inlined_call_operand.vmem [shape: f32[1,32], index: 2, kind: input, shape index: {}]
  %s3 = inlined_call_operand.vmem [shape: f32[2,256,32], index: 3, kind: output, shape index: {}]
  %s4 = sld [smem:[#allocation0]]
  $region45: #{tpu_custom_call.1} parent=0
    _
  %s6 = ssub.s32 1, %s4
  %s7 = scalar_select 0, %s6, %s4
  loop: start=0, step=1, limit=4
  $region2: #{tpu_custom_call.1} parent=0 // loop_pre_header
    _
  $region3: #{tpu_custom_call.1} parent=0 // loop_header
    %s9 = sphi 0, %s13
    %p10 = scmp.ge.s32.totalorder %s9, 4
    %s19 = sphi 0, %s21
    %s22 = sphi 0, %s19
    %s23 = sphi 0, %s22
    %s39 = sphi 0, %s23
    %s43 = sphi 0, %s43
    %s45 = sphi 0, %s43
    %s46 = sphi 0, %s45
    %s60 = sphi 0, %s46
    %s64 = sphi 0, %s64
    %s66 = sphi 0, %s64
    %s67 = sphi 0, %s66
    %s81 = sphi 0, %s67
    %s87 = sphi 0, %s89
    %s90 = sphi 0, %s87
    %s91 = sphi 0, %s90
    %s107 = sphi 0, %s91
  $region4: #{tpu_custom_call.1} parent=0 // loop_header_branch
    %12 = sbr.rel (%p10) target = $region8
  $region5: #{tpu_custom_call.1} parent=0 // loop_body
    %s14 = ssub.s32 %s9, 1
    %s15 = ssub.s32 %s9, 2
    %s16 = sadd.s32 %s9, 1
    %s17 = ssub.s32 %s9, %s16
    %p18 = scmp.eq.s32.totalorder %s17, 0
    %s20 = sadd.s32 %s19, 1
    %s21 = scalar_select %p18, %s19, %s20
    %p24 = pneg %p18
    %p25 = scmp.eq.s32.totalorder %s9, 1
    %p26 = por %p24, %p25
    %p27 = scmp.ne.s32.totalorder %s19, %s22
    %p28 = scmp.eq.s32.totalorder %s9, 0
    %p29 = por %p27, %p28
    %p30 = scmp.ne.s32.totalorder %s19, %s22
    %p31 = scmp.eq.s32.totalorder %s14, 1
    %p32 = por %p30, %p31
    %p33 = scmp.ne.s32.totalorder %s22, %s23
    %p34 = scmp.eq.s32.totalorder %s14, 0
    %p35 = por %p33, %p34
    %p36 = scmp.ne.s32.totalorder %s22, %s23
    %p37 = scmp.eq.s32.totalorder %s15, 1
    %p38 = por %p36, %p37
    %p40 = scmp.ne.s32.totalorder %s23, %s39
    %p41 = scmp.eq.s32.totalorder %s15, 0
    %p42 = por %p40, %p41
    %s44 = sadd.s32 %s43, 1
    %p47 = scmp.eq.s32.totalorder %s9, 1
    %p48 = scmp.ne.s32.totalorder %s43, %s45
    %p49 = scmp.eq.s32.totalorder %s9, 0
    %p50 = por %p48, %p49
    %p51 = scmp.ne.s32.totalorder %s43, %s45
    %p52 = scmp.eq.s32.totalorder %s14, 1
    %p53 = por %p51, %p52
    %p54 = scmp.ne.s32.totalorder %s45, %s46
    %p55 = scmp.eq.s32.totalorder %s14, 0
    %p56 = por %p54, %p55
    %p57 = scmp.ne.s32.totalorder %s45, %s46
    %p58 = scmp.eq.s32.totalorder %s15, 1
    %p59 = por %p57, %p58
    %p61 = scmp.ne.s32.totalorder %s46, %s60
    %p62 = scmp.eq.s32.totalorder %s15, 0
    %p63 = por %p61, %p62
    %s65 = sadd.s32 %s64, 1
    %p68 = scmp.eq.s32.totalorder %s9, 1
    %p69 = scmp.ne.s32.totalorder %s64, %s66
    %p70 = scmp.eq.s32.totalorder %s9, 0
    %p71 = por %p69, %p70
    %p72 = scmp.ne.s32.totalorder %s64, %s66
    %p73 = scmp.eq.s32.totalorder %s14, 1
    %p74 = por %p72, %p73
    %p75 = scmp.ne.s32.totalorder %s66, %s67
    %p76 = scmp.eq.s32.totalorder %s14, 0
    %p77 = por %p75, %p76
    %p78 = scmp.ne.s32.totalorder %s66, %s67
    %p79 = scmp.eq.s32.totalorder %s15, 1
    %p80 = por %p78, %p79
    %p82 = scmp.ne.s32.totalorder %s67, %s81
    %p83 = scmp.eq.s32.totalorder %s15, 0
    %p84 = por %p82, %p83
    %s85 = ssub.s32 %s9, %s16
    %p86 = scmp.eq.s32.totalorder %s85, 0
    %s88 = sadd.s32 %s87, 1
    %s89 = scalar_select %p86, %s87, %s88
    %p92 = pneg %p86
    %p93 = scmp.eq.s32.totalorder %s9, 1
    %p94 = por %p92, %p93
    %p95 = scmp.ne.s32.totalorder %s87, %s90
    %p96 = scmp.eq.s32.totalorder %s9, 0
    %p97 = por %p95, %p96
    %p98 = scmp.ne.s32.totalorder %s87, %s90
    %p99 = scmp.eq.s32.totalorder %s14, 1
    %p100 = por %p98, %p99
    %p101 = scmp.ne.s32.totalorder %s90, %s91
    %p102 = scmp.eq.s32.totalorder %s14, 0
    %p103 = por %p101, %p102
    %p104 = scmp.ne.s32.totalorder %s90, %s91
    %p105 = scmp.eq.s32.totalorder %s15, 1
    %p106 = por %p104, %p105
    %p108 = scmp.ne.s32.totalorder %s91, %s107
    %p109 = scmp.eq.s32.totalorder %s15, 0
    %p110 = por %p108, %p109
    %p111 = scmp.le.s32.totalorder 1, %s9
    %p112 = scmp.lt.s32.totalorder %s9, 3
    %p113 = pnand %p111, %p112
    %p114 = pneg %p113
    // Predicated region
    $region9: #{tpu_custom_call.1} parent=5 // pred_check
      _
    $region10: #{tpu_custom_call.1} parent=5 // pred_check_branch
      %116 = sbr.rel (%p113) target = $region12
    $region11: #{tpu_custom_call.1} parent=5 // pred_region
      %s117 = ssub.s32 %s9, 1
      // Predicated region
      $region13: #{tpu_custom_call.1} parent=11 // pred_check
        %p118 = pneg %p56
      $region14: #{tpu_custom_call.1} parent=11 // pred_check_branch
        %120 = sbr.rel (%p118) target = $region16
      $region15: #{tpu_custom_call.1} parent=11 // pred_region
        _
      $region16: #{tpu_custom_call.1} parent=11 // pred_fallthru
        _
      // Predicated region
      $region17: #{tpu_custom_call.1} parent=11 // pred_check
        %p121 = pneg %p77
      $region18: #{tpu_custom_call.1} parent=11 // pred_check_branch
        %123 = sbr.rel (%p121) target = $region20
      $region19: #{tpu_custom_call.1} parent=11 // pred_region
        _
      $region20: #{tpu_custom_call.1} parent=11 // pred_fallthru
        _
    $region12: #{tpu_custom_call.1} parent=5 // pred_fallthru
      _
    %p124 = scmp.lt.s32.totalorder %s9, 2
    // Predicated region
    $region21: #{tpu_custom_call.1} parent=5 // pred_check
      %p125 = pneg %p124
    $region22: #{tpu_custom_call.1} parent=5 // pred_check_branch
      %127 = sbr.rel (%p125) target = $region24
    $region23: #{tpu_custom_call.1} parent=5 // pred_region
      // Predicated region
      $region25: #{tpu_custom_call.1} parent=23 // pred_check
        %p128 = pneg %p29
      $region26: #{tpu_custom_call.1} parent=23 // pred_check_branch
        %130 = sbr.rel (%p128) target = $region28
      $region27: #{tpu_custom_call.1} parent=23 // pred_region
        %p131 = scmp.lt.s32.totalorder %s9, 1
        %s132 = scalar_select %p131, %s9, 1
        %s133 = smul.addr %s132, 112
        %s134 = smul.addr %s133, 8
        %s135 = scalar_lea.vmem %s0, %s134
      $region28: #{tpu_custom_call.1} parent=23 // pred_fallthru
        _
    $region24: #{tpu_custom_call.1} parent=5 // pred_fallthru
      _
    %p136 = scmp.le.s32.totalorder 1, %s9
    %p137 = scmp.lt.s32.totalorder %s9, 3
    %p138 = pnand %p136, %p137
    %p139 = pneg %p138
    // Predicated region
    $region29: #{tpu_custom_call.1} parent=5 // pred_check
      _
    $region30: #{tpu_custom_call.1} parent=5 // pred_check_branch
      %141 = sbr.rel (%p138) target = $region32
    $region31: #{tpu_custom_call.1} parent=5 // pred_region
      %s142 = ssub.s32 %s9, 1
      %p143 = scmp.lt.s32.totalorder %s14, 1
      %s144 = scalar_select %p143, %s14, 1
      %s145 = smul.addr %s144, 112
      %s146 = smul.addr %s145, 8
      %s147 = scalar_lea.vmem %s0, %s146
      %p148 = pneg %p35
      %p149 = pneg %p32
      %p150 = pneg %p56
      %p151 = pneg %p53
      %p152 = pneg %p77
      %p153 = pneg %p74
      %p154 = pneg %p103
      %p155 = pneg %p100
      %p156 = scmp.lt.s32.totalorder %s14, 1
      %s157 = scalar_select %p156, %s14, 1
      %s158 = smul.addr %s157, 32
      %s159 = smul.addr %s158, 8
      %s160 = scalar_lea.vmem %s3, %s159
      %p161 = scmp.lt.s32.totalorder %s14, 1
      %s162 = scalar_select %p161, %s14, 1
      %s163 = smul.addr %s162, 112
      %s164 = smul.addr %s163, 8
      %s165 = scalar_lea.vmem %s0, %s164
      %p166 = scmp.lt.s32.totalorder %s14, 1
      %s167 = scalar_select %p166, %s14, 1
      %s168 = smul.addr %s167, 32
      %s169 = smul.addr %s168, 8
      %s170 = scalar_lea.vmem %s3, %s169
      %v171 = vld [vmem:[%s165] sm:$0xff]
      %v172 = vld [vmem:[%s165 + $0x8] sm:$0xff]
      %v173 = vld [vmem:[%s165 + $0x20] sm:$0xff]
      %v174 = vld [vmem:[%s165 + $0x28] sm:$0xff]
      %v175 = vld [vmem:[%s165 + $0x40] sm:$0xff]
      %v176 = vld [vmem:[%s165 + $0x48] sm:$0xff]
      %v177 = vld [vmem:[%s165 + $0x60] sm:$0xff]
      %v178 = vld [vmem:[%s165 + $0x68] sm:$0xff]
      %v179 = vld [vmem:[%s165 + $0x80] sm:$0xff]
      %v180 = vld [vmem:[%s165 + $0x88] sm:$0xff]
      %v181 = vld [vmem:[%s165 + $0xa0] sm:$0xff]
      %v182 = vld [vmem:[%s165 + $0xa8] sm:$0xff]
      %v183 = vld [vmem:[%s165 + $0xc0] sm:$0xff]
      %v184 = vld [vmem:[%s165 + $0xc8] sm:$0xff]
      %v185 = vld [vmem:[%s165 + $0xe0] sm:$0xff]
      %v186 = vld [vmem:[%s165 + $0xe8] sm:$0xff]
      %v187 = vld [vmem:[%s165 + $0x100] sm:$0xff]
      %v188 = vld [vmem:[%s165 + $0x108] sm:$0xff]
      %v189 = vld [vmem:[%s165 + $0x120] sm:$0xff]
      %v190 = vld [vmem:[%s165 + $0x128] sm:$0xff]
      %v191 = vld [vmem:[%s165 + $0x140] sm:$0xff]
      %v192 = vld [vmem:[%s165 + $0x148] sm:$0xff]
      %v193 = vld [vmem:[%s165 + $0x160] sm:$0xff]
      %v194 = vld [vmem:[%s165 + $0x168] sm:$0xff]
      %v195 = vld [vmem:[%s165 + $0x180] sm:$0xff]
      %v196 = vld [vmem:[%s165 + $0x188] sm:$0xff]
      %v197 = vld [vmem:[%s165 + $0x1a0] sm:$0xff]
      %v198 = vld [vmem:[%s165 + $0x1a8] sm:$0xff]
      %v199 = vld [vmem:[%s165 + $0x1c0] sm:$0xff]
      %v200 = vld [vmem:[%s165 + $0x1c8] sm:$0xff]
      %v201 = vld [vmem:[%s165 + $0x1e0] sm:$0xff]
      %v202 = vld [vmem:[%s165 + $0x1e8] sm:$0xff]
      %v203 = vld [vmem:[%s165 + $0x6] sm:$0xff]
      %v204 = vld [vmem:[%s165 + $0xe] sm:$0xff]
      %v205 = vld [vmem:[%s165 + $0x26] sm:$0xff]
      %v206 = vld [vmem:[%s165 + $0x2e] sm:$0xff]
      %v207 = vld [vmem:[%s165 + $0x46] sm:$0xff]
      %v208 = vld [vmem:[%s165 + $0x4e] sm:$0xff]
      %v209 = vld [vmem:[%s165 + $0x66] sm:$0xff]
      %v210 = vld [vmem:[%s165 + $0x6e] sm:$0xff]
      %v211 = vld [vmem:[%s165 + $0x86] sm:$0xff]
      %v212 = vld [vmem:[%s165 + $0x8e] sm:$0xff]
      %v213 = vld [vmem:[%s165 + $0xa6] sm:$0xff]
      %v214 = vld [vmem:[%s165 + $0xae] sm:$0xff]
      %v215 = vld [vmem:[%s165 + $0xc6] sm:$0xff]
      %v216 = vld [vmem:[%s165 + $0xce] sm:$0xff]
      %v217 = vld [vmem:[%s165 + $0xe6] sm:$0xff]
      %v218 = vld [vmem:[%s165 + $0xee] sm:$0xff]
      %v219 = vld [vmem:[%s165 + $0x106] sm:$0xff]
      %v220 = vld [vmem:[%s165 + $0x10e] sm:$0xff]
      %v221 = vld [vmem:[%s165 + $0x126] sm:$0xff]
      %v222 = vld [vmem:[%s165 + $0x12e] sm:$0xff]
      %v223 = vld [vmem:[%s165 + $0x146] sm:$0xff]
      %v224 = vld [vmem:[%s165 + $0x14e] sm:$0xff]
      %v225 = vld [vmem:[%s165 + $0x166] sm:$0xff]
      %v226 = vld [vmem:[%s165 + $0x16e] sm:$0xff]
      %v227 = vld [vmem:[%s165 + $0x186] sm:$0xff]
      %v228 = vld [vmem:[%s165 + $0x18e] sm:$0xff]
      %v229 = vld [vmem:[%s165 + $0x1a6] sm:$0xff]
      %v230 = vld [vmem:[%s165 + $0x1ae] sm:$0xff]
      %v231 = vld [vmem:[%s165 + $0x1c6] sm:$0xff]
      %v232 = vld [vmem:[%s165 + $0x1ce] sm:$0xff]
      %v233 = vld [vmem:[%s165 + $0x1e6] sm:$0xff]
      %v234 = vld [vmem:[%s165 + $0x1ee] sm:$0xff]
      %v235 = vld [vmem:[%s165 + $0xc] sm:$0xff]
      %v236 = vld [vmem:[%s165 + $0x14] sm:$0xff]
      %v237 = vld [vmem:[%s165 + $0x2c] sm:$0xff]
      %v238 = vld [vmem:[%s165 + $0x34] sm:$0xff]
      %v239 = vld [vmem:[%s165 + $0x4c] sm:$0xff]
      %v240 = vld [vmem:[%s165 + $0x54] sm:$0xff]
      %v241 = vld [vmem:[%s165 + $0x6c] sm:$0xff]
      %v242 = vld [vmem:[%s165 + $0x74] sm:$0xff]
      %v243 = vld [vmem:[%s165 + $0x8c] sm:$0xff]
      %v244 = vld [vmem:[%s165 + $0x94] sm:$0xff]
      %v245 = vld [vmem:[%s165 + $0xac] sm:$0xff]
      %v246 = vld [vmem:[%s165 + $0xb4] sm:$0xff]
      %v247 = vld [vmem:[%s165 + $0xcc] sm:$0xff]
      %v248 = vld [vmem:[%s165 + $0xd4] sm:$0xff]
      %v249 = vld [vmem:[%s165 + $0xec] sm:$0xff]
      %v250 = vld [vmem:[%s165 + $0xf4] sm:$0xff]
      %v251 = vld [vmem:[%s165 + $0x10c] sm:$0xff]
      %v252 = vld [vmem:[%s165 + $0x114] sm:$0xff]
      %v253 = vld [vmem:[%s165 + $0x12c] sm:$0xff]
      %v254 = vld [vmem:[%s165 + $0x134] sm:$0xff]
      %v255 = vld [vmem:[%s165 + $0x14c] sm:$0xff]
      %v256 = vld [vmem:[%s165 + $0x154] sm:$0xff]
      %v257 = vld [vmem:[%s165 + $0x16c] sm:$0xff]
      %v258 = vld [vmem:[%s165 + $0x174] sm:$0xff]
      %v259 = vld [vmem:[%s165 + $0x18c] sm:$0xff]
      %v260 = vld [vmem:[%s165 + $0x194] sm:$0xff]
      %v261 = vld [vmem:[%s165 + $0x1ac] sm:$0xff]
      %v262 = vld [vmem:[%s165 + $0x1b4] sm:$0xff]
      %v263 = vld [vmem:[%s165 + $0x1cc] sm:$0xff]
      %v264 = vld [vmem:[%s165 + $0x1d4] sm:$0xff]
      %v265 = vld [vmem:[%s165 + $0x1ec] sm:$0xff]
      %v266 = vld [vmem:[%s165 + $0x1f4] sm:$0xff]
      %s267 = scalar_lea.vmem %s165, 192
      %v268 = vld [vmem:[%s267] sm:$0xff]
      %v269 = vld [vmem:[%s267 + $0x8] sm:$0xff]
      %v270 = vld [vmem:[%s267 + $0x20] sm:$0xff]
      %v271 = vld [vmem:[%s267 + $0x28] sm:$0xff]
      %v272 = vld [vmem:[%s267 + $0x40] sm:$0xff]
      %v273 = vld [vmem:[%s267 + $0x48] sm:$0xff]
      %v274 = vld [vmem:[%s267 + $0x60] sm:$0xff]
      %v275 = vld [vmem:[%s267 + $0x68] sm:$0xff]
      %v276 = vld [vmem:[%s267 + $0x80] sm:$0xff]
      %v277 = vld [vmem:[%s267 + $0x88] sm:$0xff]
      %v278 = vld [vmem:[%s267 + $0xa0] sm:$0xff]
      %v279 = vld [vmem:[%s267 + $0xa8] sm:$0xff]
      %v280 = vld [vmem:[%s267 + $0xc0] sm:$0xff]
      %v281 = vld [vmem:[%s267 + $0xc8] sm:$0xff]
      %v282 = vld [vmem:[%s267 + $0xe0] sm:$0xff]
      %v283 = vld [vmem:[%s267 + $0xe8] sm:$0xff]
      %v284 = vld [vmem:[%s267 + $0x100] sm:$0xff]
      %v285 = vld [vmem:[%s267 + $0x108] sm:$0xff]
      %v286 = vld [vmem:[%s267 + $0x120] sm:$0xff]
      %v287 = vld [vmem:[%s267 + $0x128] sm:$0xff]
      %v288 = vld [vmem:[%s267 + $0x140] sm:$0xff]
      %v289 = vld [vmem:[%s267 + $0x148] sm:$0xff]
      %v290 = vld [vmem:[%s267 + $0x160] sm:$0xff]
      %v291 = vld [vmem:[%s267 + $0x168] sm:$0xff]
      %v292 = vld [vmem:[%s267 + $0x180] sm:$0xff]
      %v293 = vld [vmem:[%s267 + $0x188] sm:$0xff]
      %v294 = vld [vmem:[%s267 + $0x1a0] sm:$0xff]
      %v295 = vld [vmem:[%s267 + $0x1a8] sm:$0xff]
      %v296 = vld [vmem:[%s267 + $0x1c0] sm:$0xff]
      %v297 = vld [vmem:[%s267 + $0x1c8] sm:$0xff]
      %v298 = vld [vmem:[%s267 + $0x1e0] sm:$0xff]
      %v299 = vld [vmem:[%s267 + $0x1e8] sm:$0xff]
      %v300 = vld [vmem:[%s267 + $0x6] sm:$0xff]
      %v301 = vld [vmem:[%s267 + $0xe] sm:$0xff]
      %v302 = vld [vmem:[%s267 + $0x26] sm:$0xff]
      %v303 = vld [vmem:[%s267 + $0x2e] sm:$0xff]
      %v304 = vld [vmem:[%s267 + $0x46] sm:$0xff]
      %v305 = vld [vmem:[%s267 + $0x4e] sm:$0xff]
      %v306 = vld [vmem:[%s267 + $0x66] sm:$0xff]
      %v307 = vld [vmem:[%s267 + $0x6e] sm:$0xff]
      %v308 = vld [vmem:[%s267 + $0x86] sm:$0xff]
      %v309 = vld [vmem:[%s267 + $0x8e] sm:$0xff]
      %v310 = vld [vmem:[%s267 + $0xa6] sm:$0xff]
      %v311 = vld [vmem:[%s267 + $0xae] sm:$0xff]
      %v312 = vld [vmem:[%s267 + $0xc6] sm:$0xff]
      %v313 = vld [vmem:[%s267 + $0xce] sm:$0xff]
      %v314 = vld [vmem:[%s267 + $0xe6] sm:$0xff]
      %v315 = vld [vmem:[%s267 + $0xee] sm:$0xff]
      %v316 = vld [vmem:[%s267 + $0x106] sm:$0xff]
      %v317 = vld [vmem:[%s267 + $0x10e] sm:$0xff]
      %v318 = vld [vmem:[%s267 + $0x126] sm:$0xff]
      %v319 = vld [vmem:[%s267 + $0x12e] sm:$0xff]
      %v320 = vld [vmem:[%s267 + $0x146] sm:$0xff]
      %v321 = vld [vmem:[%s267 + $0x14e] sm:$0xff]
      %v322 = vld [vmem:[%s267 + $0x166] sm:$0xff]
      %v323 = vld [vmem:[%s267 + $0x16e] sm:$0xff]
      %v324 = vld [vmem:[%s267 + $0x186] sm:$0xff]
      %v325 = vld [vmem:[%s267 + $0x18e] sm:$0xff]
      %v326 = vld [vmem:[%s267 + $0x1a6] sm:$0xff]
      %v327 = vld [vmem:[%s267 + $0x1ae] sm:$0xff]
      %v328 = vld [vmem:[%s267 + $0x1c6] sm:$0xff]
      %v329 = vld [vmem:[%s267 + $0x1ce] sm:$0xff]
      %v330 = vld [vmem:[%s267 + $0x1e6] sm:$0xff]
      %v331 = vld [vmem:[%s267 + $0x1ee] sm:$0xff]
      %v332 = vld [vmem:[%s267 + $0xc] sm:$0xff]
      %v333 = vld [vmem:[%s267 + $0x14] sm:$0xff]
      %v334 = vld [vmem:[%s267 + $0x2c] sm:$0xff]
      %v335 = vld [vmem:[%s267 + $0x34] sm:$0xff]
      %v336 = vld [vmem:[%s267 + $0x4c] sm:$0xff]
      %v337 = vld [vmem:[%s267 + $0x54] sm:$0xff]
      %v338 = vld [vmem:[%s267 + $0x6c] sm:$0xff]
      %v339 = vld [vmem:[%s267 + $0x74] sm:$0xff]
      %v340 = vld [vmem:[%s267 + $0x8c] sm:$0xff]
      %v341 = vld [vmem:[%s267 + $0x94] sm:$0xff]
      %v342 = vld [vmem:[%s267 + $0xac] sm:$0xff]
      %v343 = vld [vmem:[%s267 + $0xb4] sm:$0xff]
      %v344 = vld [vmem:[%s267 + $0xcc] sm:$0xff]
      %v345 = vld [vmem:[%s267 + $0xd4] sm:$0xff]
      %v346 = vld [vmem:[%s267 + $0xec] sm:$0xff]
      %v347 = vld [vmem:[%s267 + $0xf4] sm:$0xff]
      %v348 = vld [vmem:[%s267 + $0x10c] sm:$0xff]
      %v349 = vld [vmem:[%s267 + $0x114] sm:$0xff]
      %v350 = vld [vmem:[%s267 + $0x12c] sm:$0xff]
      %v351 = vld [vmem:[%s267 + $0x134] sm:$0xff]
      %v352 = vld [vmem:[%s267 + $0x14c] sm:$0xff]
      %v353 = vld [vmem:[%s267 + $0x154] sm:$0xff]
      %v354 = vld [vmem:[%s267 + $0x16c] sm:$0xff]
      %v355 = vld [vmem:[%s267 + $0x174] sm:$0xff]
      %v356 = vld [vmem:[%s267 + $0x18c] sm:$0xff]
      %v357 = vld [vmem:[%s267 + $0x194] sm:$0xff]
      %v358 = vld [vmem:[%s267 + $0x1ac] sm:$0xff]
      %v359 = vld [vmem:[%s267 + $0x1b4] sm:$0xff]
      %v360 = vld [vmem:[%s267 + $0x1cc] sm:$0xff]
      %v361 = vld [vmem:[%s267 + $0x1d4] sm:$0xff]
      %v362 = vld [vmem:[%s267 + $0x1ec] sm:$0xff]
      %v363 = vld [vmem:[%s267 + $0x1f4] sm:$0xff]
      %s364 = scalar_lea.vmem %s165, 384
      %v365 = vld [vmem:[%s364] sm:$0xff]
      %v366 = vld [vmem:[%s364 + $0x8] sm:$0xff]
      %v367 = vld [vmem:[%s364 + $0x20] sm:$0xff]
      %v368 = vld [vmem:[%s364 + $0x28] sm:$0xff]
      %v369 = vld [vmem:[%s364 + $0x40] sm:$0xff]
      %v370 = vld [vmem:[%s364 + $0x48] sm:$0xff]
      %v371 = vld [vmem:[%s364 + $0x60] sm:$0xff]
      %v372 = vld [vmem:[%s364 + $0x68] sm:$0xff]
      %v373 = vld [vmem:[%s364 + $0x80] sm:$0xff]
      %v374 = vld [vmem:[%s364 + $0x88] sm:$0xff]
      %v375 = vld [vmem:[%s364 + $0xa0] sm:$0xff]
      %v376 = vld [vmem:[%s364 + $0xa8] sm:$0xff]
      %v377 = vld [vmem:[%s364 + $0xc0] sm:$0xff]
      %v378 = vld [vmem:[%s364 + $0xc8] sm:$0xff]
      %v379 = vld [vmem:[%s364 + $0xe0] sm:$0xff]
      %v380 = vld [vmem:[%s364 + $0xe8] sm:$0xff]
      %v381 = vld [vmem:[%s364 + $0x100] sm:$0xff]
      %v382 = vld [vmem:[%s364 + $0x108] sm:$0xff]
      %v383 = vld [vmem:[%s364 + $0x120] sm:$0xff]
      %v384 = vld [vmem:[%s364 + $0x128] sm:$0xff]
      %v385 = vld [vmem:[%s364 + $0x140] sm:$0xff]
      %v386 = vld [vmem:[%s364 + $0x148] sm:$0xff]
      %v387 = vld [vmem:[%s364 + $0x160] sm:$0xff]
      %v388 = vld [vmem:[%s364 + $0x168] sm:$0xff]
      %v389 = vld [vmem:[%s364 + $0x180] sm:$0xff]
      %v390 = vld [vmem:[%s364 + $0x188] sm:$0xff]
      %v391 = vld [vmem:[%s364 + $0x1a0] sm:$0xff]
      %v392 = vld [vmem:[%s364 + $0x1a8] sm:$0xff]
      %v393 = vld [vmem:[%s364 + $0x1c0] sm:$0xff]
      %v394 = vld [vmem:[%s364 + $0x1c8] sm:$0xff]
      %v395 = vld [vmem:[%s364 + $0x1e0] sm:$0xff]
      %v396 = vld [vmem:[%s364 + $0x1e8] sm:$0xff]
      %v397 = vld [vmem:[%s364 + $0x6] sm:$0xff]
      %v398 = vld [vmem:[%s364 + $0xe] sm:$0xff]
      %v399 = vld [vmem:[%s364 + $0x26] sm:$0xff]
      %v400 = vld [vmem:[%s364 + $0x2e] sm:$0xff]
      %v401 = vld [vmem:[%s364 + $0x46] sm:$0xff]
      %v402 = vld [vmem:[%s364 + $0x4e] sm:$0xff]
      %v403 = vld [vmem:[%s364 + $0x66] sm:$0xff]
      %v404 = vld [vmem:[%s364 + $0x6e] sm:$0xff]
      %v405 = vld [vmem:[%s364 + $0x86] sm:$0xff]
      %v406 = vld [vmem:[%s364 + $0x8e] sm:$0xff]
      %v407 = vld [vmem:[%s364 + $0xa6] sm:$0xff]
      %v408 = vld [vmem:[%s364 + $0xae] sm:$0xff]
      %v409 = vld [vmem:[%s364 + $0xc6] sm:$0xff]
      %v410 = vld [vmem:[%s364 + $0xce] sm:$0xff]
      %v411 = vld [vmem:[%s364 + $0xe6] sm:$0xff]
      %v412 = vld [vmem:[%s364 + $0xee] sm:$0xff]
      %v413 = vld [vmem:[%s364 + $0x106] sm:$0xff]
      %v414 = vld [vmem:[%s364 + $0x10e] sm:$0xff]
      %v415 = vld [vmem:[%s364 + $0x126] sm:$0xff]
      %v416 = vld [vmem:[%s364 + $0x12e] sm:$0xff]
      %v417 = vld [vmem:[%s364 + $0x146] sm:$0xff]
      %v418 = vld [vmem:[%s364 + $0x14e] sm:$0xff]
      %v419 = vld [vmem:[%s364 + $0x166] sm:$0xff]
      %v420 = vld [vmem:[%s364 + $0x16e] sm:$0xff]
      %v421 = vld [vmem:[%s364 + $0x186] sm:$0xff]
      %v422 = vld [vmem:[%s364 + $0x18e] sm:$0xff]
      %v423 = vld [vmem:[%s364 + $0x1a6] sm:$0xff]
      %v424 = vld [vmem:[%s364 + $0x1ae] sm:$0xff]
      %v425 = vld [vmem:[%s364 + $0x1c6] sm:$0xff]
      %v426 = vld [vmem:[%s364 + $0x1ce] sm:$0xff]
      %v427 = vld [vmem:[%s364 + $0x1e6] sm:$0xff]
      %v428 = vld [vmem:[%s364 + $0x1ee] sm:$0xff]
      %v429 = vld [vmem:[%s364 + $0xc] sm:$0xff]
      %v430 = vld [vmem:[%s364 + $0x14] sm:$0xff]
      %v431 = vld [vmem:[%s364 + $0x2c] sm:$0xff]
      %v432 = vld [vmem:[%s364 + $0x34] sm:$0xff]
      %v433 = vld [vmem:[%s364 + $0x4c] sm:$0xff]
      %v434 = vld [vmem:[%s364 + $0x54] sm:$0xff]
      %v435 = vld [vmem:[%s364 + $0x6c] sm:$0xff]
      %v436 = vld [vmem:[%s364 + $0x74] sm:$0xff]
      %v437 = vld [vmem:[%s364 + $0x8c] sm:$0xff]
      %v438 = vld [vmem:[%s364 + $0x94] sm:$0xff]
      %v439 = vld [vmem:[%s364 + $0xac] sm:$0xff]
      %v440 = vld [vmem:[%s364 + $0xb4] sm:$0xff]
      %v441 = vld [vmem:[%s364 + $0xcc] sm:$0xff]
      %v442 = vld [vmem:[%s364 + $0xd4] sm:$0xff]
      %v443 = vld [vmem:[%s364 + $0xec] sm:$0xff]
      %v444 = vld [vmem:[%s364 + $0xf4] sm:$0xff]
      %v445 = vld [vmem:[%s364 + $0x10c] sm:$0xff]
      %v446 = vld [vmem:[%s364 + $0x114] sm:$0xff]
      %v447 = vld [vmem:[%s364 + $0x12c] sm:$0xff]
      %v448 = vld [vmem:[%s364 + $0x134] sm:$0xff]
      %v449 = vld [vmem:[%s364 + $0x14c] sm:$0xff]
      %v450 = vld [vmem:[%s364 + $0x154] sm:$0xff]
      %v451 = vld [vmem:[%s364 + $0x16c] sm:$0xff]
      %v452 = vld [vmem:[%s364 + $0x174] sm:$0xff]
      %v453 = vld [vmem:[%s364 + $0x18c] sm:$0xff]
      %v454 = vld [vmem:[%s364 + $0x194] sm:$0xff]
      %v455 = vld [vmem:[%s364 + $0x1ac] sm:$0xff]
      %v456 = vld [vmem:[%s364 + $0x1b4] sm:$0xff]
      %v457 = vld [vmem:[%s364 + $0x1cc] sm:$0xff]
      %v458 = vld [vmem:[%s364 + $0x1d4] sm:$0xff]
      %v459 = vld [vmem:[%s364 + $0x1ec] sm:$0xff]
      %v460 = vld [vmem:[%s364 + $0x1f4] sm:$0xff]
      %493 = vrot.lane.b32.xlu0 %v203, 5
      %v494 = vpop.permute.xlu0 %493
      %495 = vrot.lane.b32.xlu0 %v204, 5
      %v496 = vpop.permute.xlu0 %495
      %497 = vrot.lane.b32.xlu0 %v205, 5
      %v498 = vpop.permute.xlu0 %497
      %499 = vrot.lane.b32.xlu0 %v206, 5
      %v500 = vpop.permute.xlu0 %499
      %501 = vrot.lane.b32.xlu0 %v207, 5
      %v502 = vpop.permute.xlu0 %501
      %503 = vrot.lane.b32.xlu0 %v208, 5
      %v504 = vpop.permute.xlu0 %503
      %505 = vrot.lane.b32.xlu0 %v209, 5
      %v506 = vpop.permute.xlu0 %505
      %507 = vrot.lane.b32.xlu0 %v210, 5
      %v508 = vpop.permute.xlu0 %507
      %509 = vrot.lane.b32.xlu0 %v211, 5
      %v510 = vpop.permute.xlu0 %509
      %511 = vrot.lane.b32.xlu0 %v212, 5
      %v512 = vpop.permute.xlu0 %511
      %513 = vrot.lane.b32.xlu0 %v213, 5
      %v514 = vpop.permute.xlu0 %513
      %515 = vrot.lane.b32.xlu0 %v214, 5
      %v516 = vpop.permute.xlu0 %515
      %517 = vrot.lane.b32.xlu0 %v215, 5
      %v518 = vpop.permute.xlu0 %517
      %519 = vrot.lane.b32.xlu0 %v216, 5
      %v520 = vpop.permute.xlu0 %519
      %521 = vrot.lane.b32.xlu0 %v217, 5
      %v522 = vpop.permute.xlu0 %521
      %523 = vrot.lane.b32.xlu0 %v218, 5
      %v524 = vpop.permute.xlu0 %523
      %525 = vrot.lane.b32.xlu0 %v219, 5
      %v526 = vpop.permute.xlu0 %525
      %527 = vrot.lane.b32.xlu0 %v220, 5
      %v528 = vpop.permute.xlu0 %527
      %529 = vrot.lane.b32.xlu0 %v221, 5
      %v530 = vpop.permute.xlu0 %529
      %531 = vrot.lane.b32.xlu0 %v222, 5
      %v532 = vpop.permute.xlu0 %531
      %533 = vrot.lane.b32.xlu0 %v223, 5
      %v534 = vpop.permute.xlu0 %533
      %535 = vrot.lane.b32.xlu0 %v224, 5
      %v536 = vpop.permute.xlu0 %535
      %537 = vrot.lane.b32.xlu0 %v225, 5
      %v538 = vpop.permute.xlu0 %537
      %539 = vrot.lane.b32.xlu0 %v226, 5
      %v540 = vpop.permute.xlu0 %539
      %541 = vrot.lane.b32.xlu0 %v227, 5
      %v542 = vpop.permute.xlu0 %541
      %543 = vrot.lane.b32.xlu0 %v228, 5
      %v544 = vpop.permute.xlu0 %543
      %545 = vrot.lane.b32.xlu0 %v229, 5
      %v546 = vpop.permute.xlu0 %545
      %547 = vrot.lane.b32.xlu0 %v230, 5
      %v548 = vpop.permute.xlu0 %547
      %549 = vrot.lane.b32.xlu0 %v231, 5
      %v550 = vpop.permute.xlu0 %549
      %551 = vrot.lane.b32.xlu0 %v232, 5
      %v552 = vpop.permute.xlu0 %551
      %553 = vrot.lane.b32.xlu0 %v233, 5
      %v554 = vpop.permute.xlu0 %553
      %555 = vrot.lane.b32.xlu0 %v234, 5
      %v556 = vpop.permute.xlu0 %555
      %621 = vrot.lane.b32.xlu0 %v235, 10
      %v622 = vpop.permute.xlu0 %621
      %623 = vrot.lane.b32.xlu0 %v236, 10
      %v624 = vpop.permute.xlu0 %623
      %625 = vrot.lane.b32.xlu0 %v237, 10
      %v626 = vpop.permute.xlu0 %625
      %627 = vrot.lane.b32.xlu0 %v238, 10
      %v628 = vpop.permute.xlu0 %627
      %629 = vrot.lane.b32.xlu0 %v239, 10
      %v630 = vpop.permute.xlu0 %629
      %631 = vrot.lane.b32.xlu0 %v240, 10
      %v632 = vpop.permute.xlu0 %631
      %633 = vrot.lane.b32.xlu0 %v241, 10
      %v634 = vpop.permute.xlu0 %633
      %635 = vrot.lane.b32.xlu0 %v242, 10
      %v636 = vpop.permute.xlu0 %635
      %637 = vrot.lane.b32.xlu0 %v243, 10
      %v638 = vpop.permute.xlu0 %637
      %639 = vrot.lane.b32.xlu0 %v244, 10
      %v640 = vpop.permute.xlu0 %639
      %641 = vrot.lane.b32.xlu0 %v245, 10
      %v642 = vpop.permute.xlu0 %641
      %643 = vrot.lane.b32.xlu0 %v246, 10
      %v644 = vpop.permute.xlu0 %643
      %645 = vrot.lane.b32.xlu0 %v247, 10
      %v646 = vpop.permute.xlu0 %645
      %647 = vrot.lane.b32.xlu0 %v248, 10
      %v648 = vpop.permute.xlu0 %647
      %649 = vrot.lane.b32.xlu0 %v249, 10
      %v650 = vpop.permute.xlu0 %649
      %651 = vrot.lane.b32.xlu0 %v250, 10
      %v652 = vpop.permute.xlu0 %651
      %653 = vrot.lane.b32.xlu0 %v251, 10
      %v654 = vpop.permute.xlu0 %653
      %655 = vrot.lane.b32.xlu0 %v252, 10
      %v656 = vpop.permute.xlu0 %655
      %657 = vrot.lane.b32.xlu0 %v253, 10
      %v658 = vpop.permute.xlu0 %657
      %659 = vrot.lane.b32.xlu0 %v254, 10
      %v660 = vpop.permute.xlu0 %659
      %661 = vrot.lane.b32.xlu0 %v255, 10
      %v662 = vpop.permute.xlu0 %661
      %663 = vrot.lane.b32.xlu0 %v256, 10
      %v664 = vpop.permute.xlu0 %663
      %665 = vrot.lane.b32.xlu0 %v257, 10
      %v666 = vpop.permute.xlu0 %665
      %667 = vrot.lane.b32.xlu0 %v258, 10
      %v668 = vpop.permute.xlu0 %667
      %669 = vrot.lane.b32.xlu0 %v259, 10
      %v670 = vpop.permute.xlu0 %669
      %671 = vrot.lane.b32.xlu0 %v260, 10
      %v672 = vpop.permute.xlu0 %671
      %673 = vrot.lane.b32.xlu0 %v261, 10
      %v674 = vpop.permute.xlu0 %673
      %675 = vrot.lane.b32.xlu0 %v262, 10
      %v676 = vpop.permute.xlu0 %675
      %677 = vrot.lane.b32.xlu0 %v263, 10
      %v678 = vpop.permute.xlu0 %677
      %679 = vrot.lane.b32.xlu0 %v264, 10
      %v680 = vpop.permute.xlu0 %679
      %681 = vrot.lane.b32.xlu0 %v265, 10
      %v682 = vpop.permute.xlu0 %681
      %683 = vrot.lane.b32.xlu0 %v266, 10
      %v684 = vpop.permute.xlu0 %683
      %749 = vrot.lane.b32.xlu0 %v268, 15
      %v750 = vpop.permute.xlu0 %749
      %751 = vrot.lane.b32.xlu0 %v269, 15
      %v752 = vpop.permute.xlu0 %751
      %753 = vrot.lane.b32.xlu0 %v270, 15
      %v754 = vpop.permute.xlu0 %753
      %755 = vrot.lane.b32.xlu0 %v271, 15
      %v756 = vpop.permute.xlu0 %755
      %757 = vrot.lane.b32.xlu0 %v272, 15
      %v758 = vpop.permute.xlu0 %757
      %759 = vrot.lane.b32.xlu0 %v273, 15
      %v760 = vpop.permute.xlu0 %759
      %761 = vrot.lane.b32.xlu0 %v274, 15
      %v762 = vpop.permute.xlu0 %761
      %763 = vrot.lane.b32.xlu0 %v275, 15
      %v764 = vpop.permute.xlu0 %763
      %765 = vrot.lane.b32.xlu0 %v276, 15
      %v766 = vpop.permute.xlu0 %765
      %767 = vrot.lane.b32.xlu0 %v277, 15
      %v768 = vpop.permute.xlu0 %767
      %769 = vrot.lane.b32.xlu0 %v278, 15
      %v770 = vpop.permute.xlu0 %769
      %771 = vrot.lane.b32.xlu0 %v279, 15
      %v772 = vpop.permute.xlu0 %771
      %773 = vrot.lane.b32.xlu0 %v280, 15
      %v774 = vpop.permute.xlu0 %773
      %775 = vrot.lane.b32.xlu0 %v281, 15
      %v776 = vpop.permute.xlu0 %775
      %777 = vrot.lane.b32.xlu0 %v282, 15
      %v778 = vpop.permute.xlu0 %777
      %779 = vrot.lane.b32.xlu0 %v283, 15
      %v780 = vpop.permute.xlu0 %779
      %781 = vrot.lane.b32.xlu0 %v284, 15
      %v782 = vpop.permute.xlu0 %781
      %783 = vrot.lane.b32.xlu0 %v285, 15
      %v784 = vpop.permute.xlu0 %783
      %785 = vrot.lane.b32.xlu0 %v286, 15
      %v786 = vpop.permute.xlu0 %785
      %787 = vrot.lane.b32.xlu0 %v287, 15
      %v788 = vpop.permute.xlu0 %787
      %789 = vrot.lane.b32.xlu0 %v288, 15
      %v790 = vpop.permute.xlu0 %789
      %791 = vrot.lane.b32.xlu0 %v289, 15
      %v792 = vpop.permute.xlu0 %791
      %793 = vrot.lane.b32.xlu0 %v290, 15
      %v794 = vpop.permute.xlu0 %793
      %795 = vrot.lane.b32.xlu0 %v291, 15
      %v796 = vpop.permute.xlu0 %795
      %797 = vrot.lane.b32.xlu0 %v292, 15
      %v798 = vpop.permute.xlu0 %797
      %799 = vrot.lane.b32.xlu0 %v293, 15
      %v800 = vpop.permute.xlu0 %799
      %801 = vrot.lane.b32.xlu0 %v294, 15
      %v802 = vpop.permute.xlu0 %801
      %803 = vrot.lane.b32.xlu0 %v295, 15
      %v804 = vpop.permute.xlu0 %803
      %805 = vrot.lane.b32.xlu0 %v296, 15
      %v806 = vpop.permute.xlu0 %805
      %807 = vrot.lane.b32.xlu0 %v297, 15
      %v808 = vpop.permute.xlu0 %807
      %809 = vrot.lane.b32.xlu0 %v298, 15
      %v810 = vpop.permute.xlu0 %809
      %811 = vrot.lane.b32.xlu0 %v299, 15
      %v812 = vpop.permute.xlu0 %811
      %877 = vrot.lane.b32.xlu0 %v300, 20
      %v878 = vpop.permute.xlu0 %877
      %879 = vrot.lane.b32.xlu0 %v301, 20
      %v880 = vpop.permute.xlu0 %879
      %881 = vrot.lane.b32.xlu0 %v302, 20
      %v882 = vpop.permute.xlu0 %881
      %883 = vrot.lane.b32.xlu0 %v303, 20
      %v884 = vpop.permute.xlu0 %883
      %885 = vrot.lane.b32.xlu0 %v304, 20
      %v886 = vpop.permute.xlu0 %885
      %887 = vrot.lane.b32.xlu0 %v305, 20
      %v888 = vpop.permute.xlu0 %887
      %889 = vrot.lane.b32.xlu0 %v306, 20
      %v890 = vpop.permute.xlu0 %889
      %891 = vrot.lane.b32.xlu0 %v307, 20
      %v892 = vpop.permute.xlu0 %891
      %893 = vrot.lane.b32.xlu0 %v308, 20
      %v894 = vpop.permute.xlu0 %893
      %895 = vrot.lane.b32.xlu0 %v309, 20
      %v896 = vpop.permute.xlu0 %895
      %897 = vrot.lane.b32.xlu0 %v310, 20
      %v898 = vpop.permute.xlu0 %897
      %899 = vrot.lane.b32.xlu0 %v311, 20
      %v900 = vpop.permute.xlu0 %899
      %901 = vrot.lane.b32.xlu0 %v312, 20
      %v902 = vpop.permute.xlu0 %901
      %903 = vrot.lane.b32.xlu0 %v313, 20
      %v904 = vpop.permute.xlu0 %903
      %905 = vrot.lane.b32.xlu0 %v314, 20
      %v906 = vpop.permute.xlu0 %905
      %907 = vrot.lane.b32.xlu0 %v315, 20
      %v908 = vpop.permute.xlu0 %907
      %909 = vrot.lane.b32.xlu0 %v316, 20
      %v910 = vpop.permute.xlu0 %909
      %911 = vrot.lane.b32.xlu0 %v317, 20
      %v912 = vpop.permute.xlu0 %911
      %913 = vrot.lane.b32.xlu0 %v318, 20
      %v914 = vpop.permute.xlu0 %913
      %915 = vrot.lane.b32.xlu0 %v319, 20
      %v916 = vpop.permute.xlu0 %915
      %917 = vrot.lane.b32.xlu0 %v320, 20
      %v918 = vpop.permute.xlu0 %917
      %919 = vrot.lane.b32.xlu0 %v321, 20
      %v920 = vpop.permute.xlu0 %919
      %921 = vrot.lane.b32.xlu0 %v322, 20
      %v922 = vpop.permute.xlu0 %921
      %923 = vrot.lane.b32.xlu0 %v323, 20
      %v924 = vpop.permute.xlu0 %923
      %925 = vrot.lane.b32.xlu0 %v324, 20
      %v926 = vpop.permute.xlu0 %925
      %927 = vrot.lane.b32.xlu0 %v325, 20
      %v928 = vpop.permute.xlu0 %927
      %929 = vrot.lane.b32.xlu0 %v326, 20
      %v930 = vpop.permute.xlu0 %929
      %931 = vrot.lane.b32.xlu0 %v327, 20
      %v932 = vpop.permute.xlu0 %931
      %933 = vrot.lane.b32.xlu0 %v328, 20
      %v934 = vpop.permute.xlu0 %933
      %935 = vrot.lane.b32.xlu0 %v329, 20
      %v936 = vpop.permute.xlu0 %935
      %937 = vrot.lane.b32.xlu0 %v330, 20
      %v938 = vpop.permute.xlu0 %937
      %939 = vrot.lane.b32.xlu0 %v331, 20
      %v940 = vpop.permute.xlu0 %939
      %1005 = vrot.lane.b32.xlu0 %v332, 25
      %v1006 = vpop.permute.xlu0 %1005
      %1007 = vrot.lane.b32.xlu0 %v333, 25
      %v1008 = vpop.permute.xlu0 %1007
      %1009 = vrot.lane.b32.xlu0 %v334, 25
      %v1010 = vpop.permute.xlu0 %1009
      %1011 = vrot.lane.b32.xlu0 %v335, 25
      %v1012 = vpop.permute.xlu0 %1011
      %1013 = vrot.lane.b32.xlu0 %v336, 25
      %v1014 = vpop.permute.xlu0 %1013
      %1015 = vrot.lane.b32.xlu0 %v337, 25
      %v1016 = vpop.permute.xlu0 %1015
      %1017 = vrot.lane.b32.xlu0 %v338, 25
      %v1018 = vpop.permute.xlu0 %1017
      %1019 = vrot.lane.b32.xlu0 %v339, 25
      %v1020 = vpop.permute.xlu0 %1019
      %1021 = vrot.lane.b32.xlu0 %v340, 25
      %v1022 = vpop.permute.xlu0 %1021
      %1023 = vrot.lane.b32.xlu0 %v341, 25
      %v1024 = vpop.permute.xlu0 %1023
      %1025 = vrot.lane.b32.xlu0 %v342, 25
      %v1026 = vpop.permute.xlu0 %1025
      %1027 = vrot.lane.b32.xlu0 %v343, 25
      %v1028 = vpop.permute.xlu0 %1027
      %1029 = vrot.lane.b32.xlu0 %v344, 25
      %v1030 = vpop.permute.xlu0 %1029
      %1031 = vrot.lane.b32.xlu0 %v345, 25
      %v1032 = vpop.permute.xlu0 %1031
      %1033 = vrot.lane.b32.xlu0 %v346, 25
      %v1034 = vpop.permute.xlu0 %1033
      %1035 = vrot.lane.b32.xlu0 %v347, 25
      %v1036 = vpop.permute.xlu0 %1035
      %1037 = vrot.lane.b32.xlu0 %v348, 25
      %v1038 = vpop.permute.xlu0 %1037
      %1039 = vrot.lane.b32.xlu0 %v349, 25
      %v1040 = vpop.permute.xlu0 %1039
      %1041 = vrot.lane.b32.xlu0 %v350, 25
      %v1042 = vpop.permute.xlu0 %1041
      %1043 = vrot.lane.b32.xlu0 %v351, 25
      %v1044 = vpop.permute.xlu0 %1043
      %1045 = vrot.lane.b32.xlu0 %v352, 25
      %v1046 = vpop.permute.xlu0 %1045
      %1047 = vrot.lane.b32.xlu0 %v353, 25
      %v1048 = vpop.permute.xlu0 %1047
      %1049 = vrot.lane.b32.xlu0 %v354, 25
      %v1050 = vpop.permute.xlu0 %1049
      %1051 = vrot.lane.b32.xlu0 %v355, 25
      %v1052 = vpop.permute.xlu0 %1051
      %1053 = vrot.lane.b32.xlu0 %v356, 25
      %v1054 = vpop.permute.xlu0 %1053
      %1055 = vrot.lane.b32.xlu0 %v357, 25
      %v1056 = vpop.permute.xlu0 %1055
      %1057 = vrot.lane.b32.xlu0 %v358, 25
      %v1058 = vpop.permute.xlu0 %1057
      %1059 = vrot.lane.b32.xlu0 %v359, 25
      %v1060 = vpop.permute.xlu0 %1059
      %1061 = vrot.lane.b32.xlu0 %v360, 25
      %v1062 = vpop.permute.xlu0 %1061
      %1063 = vrot.lane.b32.xlu0 %v361, 25
      %v1064 = vpop.permute.xlu0 %1063
      %1065 = vrot.lane.b32.xlu0 %v362, 25
      %v1066 = vpop.permute.xlu0 %1065
      %1067 = vrot.lane.b32.xlu0 %v363, 25
      %v1068 = vpop.permute.xlu0 %1067
      %1133 = vrot.lane.b32.xlu0 %v365, 30
      %v1134 = vpop.permute.xlu0 %1133
      %1135 = vrot.lane.b32.xlu0 %v366, 30
      %v1136 = vpop.permute.xlu0 %1135
      %1137 = vrot.lane.b32.xlu0 %v367, 30
      %v1138 = vpop.permute.xlu0 %1137
      %1139 = vrot.lane.b32.xlu0 %v368, 30
      %v1140 = vpop.permute.xlu0 %1139
      %1141 = vrot.lane.b32.xlu0 %v369, 30
      %v1142 = vpop.permute.xlu0 %1141
      %1143 = vrot.lane.b32.xlu0 %v370, 30
      %v1144 = vpop.permute.xlu0 %1143
      %1145 = vrot.lane.b32.xlu0 %v371, 30
      %v1146 = vpop.permute.xlu0 %1145
      %1147 = vrot.lane.b32.xlu0 %v372, 30
      %v1148 = vpop.permute.xlu0 %1147
      %1149 = vrot.lane.b32.xlu0 %v373, 30
      %v1150 = vpop.permute.xlu0 %1149
      %1151 = vrot.lane.b32.xlu0 %v374, 30
      %v1152 = vpop.permute.xlu0 %1151
      %1153 = vrot.lane.b32.xlu0 %v375, 30
      %v1154 = vpop.permute.xlu0 %1153
      %1155 = vrot.lane.b32.xlu0 %v376, 30
      %v1156 = vpop.permute.xlu0 %1155
      %1157 = vrot.lane.b32.xlu0 %v377, 30
      %v1158 = vpop.permute.xlu0 %1157
      %1159 = vrot.lane.b32.xlu0 %v378, 30
      %v1160 = vpop.permute.xlu0 %1159
      %1161 = vrot.lane.b32.xlu0 %v379, 30
      %v1162 = vpop.permute.xlu0 %1161
      %1163 = vrot.lane.b32.xlu0 %v380, 30
      %v1164 = vpop.permute.xlu0 %1163
      %1165 = vrot.lane.b32.xlu0 %v381, 30
      %v1166 = vpop.permute.xlu0 %1165
      %1167 = vrot.lane.b32.xlu0 %v382, 30
      %v1168 = vpop.permute.xlu0 %1167
      %1169 = vrot.lane.b32.xlu0 %v383, 30
      %v1170 = vpop.permute.xlu0 %1169
      %1171 = vrot.lane.b32.xlu0 %v384, 30
      %v1172 = vpop.permute.xlu0 %1171
      %1173 = vrot.lane.b32.xlu0 %v385, 30
      %v1174 = vpop.permute.xlu0 %1173
      %1175 = vrot.lane.b32.xlu0 %v386, 30
      %v1176 = vpop.permute.xlu0 %1175
      %1177 = vrot.lane.b32.xlu0 %v387, 30
      %v1178 = vpop.permute.xlu0 %1177
      %1179 = vrot.lane.b32.xlu0 %v388, 30
      %v1180 = vpop.permute.xlu0 %1179
      %1181 = vrot.lane.b32.xlu0 %v389, 30
      %v1182 = vpop.permute.xlu0 %1181
      %1183 = vrot.lane.b32.xlu0 %v390, 30
      %v1184 = vpop.permute.xlu0 %1183
      %1185 = vrot.lane.b32.xlu0 %v391, 30
      %v1186 = vpop.permute.xlu0 %1185
      %1187 = vrot.lane.b32.xlu0 %v392, 30
      %v1188 = vpop.permute.xlu0 %1187
      %1189 = vrot.lane.b32.xlu0 %v393, 30
      %v1190 = vpop.permute.xlu0 %1189
      %1191 = vrot.lane.b32.xlu0 %v394, 30
      %v1192 = vpop.permute.xlu0 %1191
      %1193 = vrot.lane.b32.xlu0 %v395, 30
      %v1194 = vpop.permute.xlu0 %1193
      %1195 = vrot.lane.b32.xlu0 %v396, 30
      %v1196 = vpop.permute.xlu0 %1195
      %1261 = vrot.lane.b32.xlu0 %v397, 35
      %v1262 = vpop.permute.xlu0 %1261
      %1263 = vrot.lane.b32.xlu0 %v398, 35
      %v1264 = vpop.permute.xlu0 %1263
      %1265 = vrot.lane.b32.xlu0 %v399, 35
      %v1266 = vpop.permute.xlu0 %1265
      %1267 = vrot.lane.b32.xlu0 %v400, 35
      %v1268 = vpop.permute.xlu0 %1267
      %1269 = vrot.lane.b32.xlu0 %v401, 35
      %v1270 = vpop.permute.xlu0 %1269
      %1271 = vrot.lane.b32.xlu0 %v402, 35
      %v1272 = vpop.permute.xlu0 %1271
      %1273 = vrot.lane.b32.xlu0 %v403, 35
      %v1274 = vpop.permute.xlu0 %1273
      %1275 = vrot.lane.b32.xlu0 %v404, 35
      %v1276 = vpop.permute.xlu0 %1275
      %1277 = vrot.lane.b32.xlu0 %v405, 35
      %v1278 = vpop.permute.xlu0 %1277
      %1279 = vrot.lane.b32.xlu0 %v406, 35
      %v1280 = vpop.permute.xlu0 %1279
      %1281 = vrot.lane.b32.xlu0 %v407, 35
      %v1282 = vpop.permute.xlu0 %1281
      %1283 = vrot.lane.b32.xlu0 %v408, 35
      %v1284 = vpop.permute.xlu0 %1283
      %1285 = vrot.lane.b32.xlu0 %v409, 35
      %v1286 = vpop.permute.xlu0 %1285
      %1287 = vrot.lane.b32.xlu0 %v410, 35
      %v1288 = vpop.permute.xlu0 %1287
      %1289 = vrot.lane.b32.xlu0 %v411, 35
      %v1290 = vpop.permute.xlu0 %1289
      %1291 = vrot.lane.b32.xlu0 %v412, 35
      %v1292 = vpop.permute.xlu0 %1291
      %1293 = vrot.lane.b32.xlu0 %v413, 35
      %v1294 = vpop.permute.xlu0 %1293
      %1295 = vrot.lane.b32.xlu0 %v414, 35
      %v1296 = vpop.permute.xlu0 %1295
      %1297 = vrot.lane.b32.xlu0 %v415, 35
      %v1298 = vpop.permute.xlu0 %1297
      %1299 = vrot.lane.b32.xlu0 %v416, 35
      %v1300 = vpop.permute.xlu0 %1299
      %1301 = vrot.lane.b32.xlu0 %v417, 35
      %v1302 = vpop.permute.xlu0 %1301
      %1303 = vrot.lane.b32.xlu0 %v418, 35
      %v1304 = vpop.permute.xlu0 %1303
      %1305 = vrot.lane.b32.xlu0 %v419, 35
      %v1306 = vpop.permute.xlu0 %1305
      %1307 = vrot.lane.b32.xlu0 %v420, 35
      %v1308 = vpop.permute.xlu0 %1307
      %1309 = vrot.lane.b32.xlu0 %v421, 35
      %v1310 = vpop.permute.xlu0 %1309
      %1311 = vrot.lane.b32.xlu0 %v422, 35
      %v1312 = vpop.permute.xlu0 %1311
      %1313 = vrot.lane.b32.xlu0 %v423, 35
      %v1314 = vpop.permute.xlu0 %1313
      %1315 = vrot.lane.b32.xlu0 %v424, 35
      %v1316 = vpop.permute.xlu0 %1315
      %1317 = vrot.lane.b32.xlu0 %v425, 35
      %v1318 = vpop.permute.xlu0 %1317
      %1319 = vrot.lane.b32.xlu0 %v426, 35
      %v1320 = vpop.permute.xlu0 %1319
      %1321 = vrot.lane.b32.xlu0 %v427, 35
      %v1322 = vpop.permute.xlu0 %1321
      %1323 = vrot.lane.b32.xlu0 %v428, 35
      %v1324 = vpop.permute.xlu0 %1323
      %1389 = vrot.lane.b32.xlu0 %v429, 40
      %v1390 = vpop.permute.xlu0 %1389
      %1391 = vrot.lane.b32.xlu0 %v430, 40
      %v1392 = vpop.permute.xlu0 %1391
      %1393 = vrot.lane.b32.xlu0 %v431, 40
      %v1394 = vpop.permute.xlu0 %1393
      %1395 = vrot.lane.b32.xlu0 %v432, 40
      %v1396 = vpop.permute.xlu0 %1395
      %1397 = vrot.lane.b32.xlu0 %v433, 40
      %v1398 = vpop.permute.xlu0 %1397
      %1399 = vrot.lane.b32.xlu0 %v434, 40
      %v1400 = vpop.permute.xlu0 %1399
      %1401 = vrot.lane.b32.xlu0 %v435, 40
      %v1402 = vpop.permute.xlu0 %1401
      %1403 = vrot.lane.b32.xlu0 %v436, 40
      %v1404 = vpop.permute.xlu0 %1403
      %1405 = vrot.lane.b32.xlu0 %v437, 40
      %v1406 = vpop.permute.xlu0 %1405
      %1407 = vrot.lane.b32.xlu0 %v438, 40
      %v1408 = vpop.permute.xlu0 %1407
      %1409 = vrot.lane.b32.xlu0 %v439, 40
      %v1410 = vpop.permute.xlu0 %1409
      %1411 = vrot.lane.b32.xlu0 %v440, 40
      %v1412 = vpop.permute.xlu0 %1411
      %1413 = vrot.lane.b32.xlu0 %v441, 40
      %v1414 = vpop.permute.xlu0 %1413
      %1415 = vrot.lane.b32.xlu0 %v442, 40
      %v1416 = vpop.permute.xlu0 %1415
      %1417 = vrot.lane.b32.xlu0 %v443, 40
      %v1418 = vpop.permute.xlu0 %1417
      %1419 = vrot.lane.b32.xlu0 %v444, 40
      %v1420 = vpop.permute.xlu0 %1419
      %1421 = vrot.lane.b32.xlu0 %v445, 40
      %v1422 = vpop.permute.xlu0 %1421
      %1423 = vrot.lane.b32.xlu0 %v446, 40
      %v1424 = vpop.permute.xlu0 %1423
      %1425 = vrot.lane.b32.xlu0 %v447, 40
      %v1426 = vpop.permute.xlu0 %1425
      %1427 = vrot.lane.b32.xlu0 %v448, 40
      %v1428 = vpop.permute.xlu0 %1427
      %1429 = vrot.lane.b32.xlu0 %v449, 40
      %v1430 = vpop.permute.xlu0 %1429
      %1431 = vrot.lane.b32.xlu0 %v450, 40
      %v1432 = vpop.permute.xlu0 %1431
      %1433 = vrot.lane.b32.xlu0 %v451, 40
      %v1434 = vpop.permute.xlu0 %1433
      %1435 = vrot.lane.b32.xlu0 %v452, 40
      %v1436 = vpop.permute.xlu0 %1435
      %1437 = vrot.lane.b32.xlu0 %v453, 40
      %v1438 = vpop.permute.xlu0 %1437
      %1439 = vrot.lane.b32.xlu0 %v454, 40
      %v1440 = vpop.permute.xlu0 %1439
      %1441 = vrot.lane.b32.xlu0 %v455, 40
      %v1442 = vpop.permute.xlu0 %1441
      %1443 = vrot.lane.b32.xlu0 %v456, 40
      %v1444 = vpop.permute.xlu0 %1443
      %1445 = vrot.lane.b32.xlu0 %v457, 40
      %v1446 = vpop.permute.xlu0 %1445
      %1447 = vrot.lane.b32.xlu0 %v458, 40
      %v1448 = vpop.permute.xlu0 %1447
      %1449 = vrot.lane.b32.xlu0 %v459, 40
      %v1450 = vpop.permute.xlu0 %1449
      %1451 = vrot.lane.b32.xlu0 %v460, 40
      %v1452 = vpop.permute.xlu0 %1451
      %vm1485 = vcmask 39936
      %v1486 = vsel %vm1485, %v171, %v494
      %v1487 = vsel %vm1485, %v172, %v496
      %v1488 = vsel %vm1485, %v173, %v498
      %v1489 = vsel %vm1485, %v174, %v500
      %v1490 = vsel %vm1485, %v175, %v502
      %v1491 = vsel %vm1485, %v176, %v504
      %v1492 = vsel %vm1485, %v177, %v506
      %v1493 = vsel %vm1485, %v178, %v508
      %v1494 = vsel %vm1485, %v179, %v510
      %v1495 = vsel %vm1485, %v180, %v512
      %v1496 = vsel %vm1485, %v181, %v514
      %v1497 = vsel %vm1485, %v182, %v516
      %v1498 = vsel %vm1485, %v183, %v518
      %v1499 = vsel %vm1485, %v184, %v520
      %v1500 = vsel %vm1485, %v185, %v522
      %v1501 = vsel %vm1485, %v186, %v524
      %v1502 = vsel %vm1485, %v187, %v526
      %v1503 = vsel %vm1485, %v188, %v528
      %v1504 = vsel %vm1485, %v189, %v530
      %v1505 = vsel %vm1485, %v190, %v532
      %v1506 = vsel %vm1485, %v191, %v534
      %v1507 = vsel %vm1485, %v192, %v536
      %v1508 = vsel %vm1485, %v193, %v538
      %v1509 = vsel %vm1485, %v194, %v540
      %v1510 = vsel %vm1485, %v195, %v542
      %v1511 = vsel %vm1485, %v196, %v544
      %v1512 = vsel %vm1485, %v197, %v546
      %v1513 = vsel %vm1485, %v198, %v548
      %v1514 = vsel %vm1485, %v199, %v550
      %v1515 = vsel %vm1485, %v200, %v552
      %v1516 = vsel %vm1485, %v201, %v554
      %v1517 = vsel %vm1485, %v202, %v556
      %vm1518 = vcmask 80896
      %v1519 = vsel %vm1518, %v1486, %v622
      %v1520 = vsel %vm1518, %v1487, %v624
      %v1521 = vsel %vm1518, %v1488, %v626
      %v1522 = vsel %vm1518, %v1489, %v628
      %v1523 = vsel %vm1518, %v1490, %v630
      %v1524 = vsel %vm1518, %v1491, %v632
      %v1525 = vsel %vm1518, %v1492, %v634
      %v1526 = vsel %vm1518, %v1493, %v636
      %v1527 = vsel %vm1518, %v1494, %v638
      %v1528 = vsel %vm1518, %v1495, %v640
      %v1529 = vsel %vm1518, %v1496, %v642
      %v1530 = vsel %vm1518, %v1497, %v644
      %v1531 = vsel %vm1518, %v1498, %v646
      %v1532 = vsel %vm1518, %v1499, %v648
      %v1533 = vsel %vm1518, %v1500, %v650
      %v1534 = vsel %vm1518, %v1501, %v652
      %v1535 = vsel %vm1518, %v1502, %v654
      %v1536 = vsel %vm1518, %v1503, %v656
      %v1537 = vsel %vm1518, %v1504, %v658
      %v1538 = vsel %vm1518, %v1505, %v660
      %v1539 = vsel %vm1518, %v1506, %v662
      %v1540 = vsel %vm1518, %v1507, %v664
      %v1541 = vsel %vm1518, %v1508, %v666
      %v1542 = vsel %vm1518, %v1509, %v668
      %v1543 = vsel %vm1518, %v1510, %v670
      %v1544 = vsel %vm1518, %v1511, %v672
      %v1545 = vsel %vm1518, %v1512, %v674
      %v1546 = vsel %vm1518, %v1513, %v676
      %v1547 = vsel %vm1518, %v1514, %v678
      %v1548 = vsel %vm1518, %v1515, %v680
      %v1549 = vsel %vm1518, %v1516, %v682
      %v1550 = vsel %vm1518, %v1517, %v684
      %vm1551 = vcmask 121856
      %v1552 = vsel %vm1551, %v1519, %v750
      %v1553 = vsel %vm1551, %v1520, %v752
      %v1554 = vsel %vm1551, %v1521, %v754
      %v1555 = vsel %vm1551, %v1522, %v756
      %v1556 = vsel %vm1551, %v1523, %v758
      %v1557 = vsel %vm1551, %v1524, %v760
      %v1558 = vsel %vm1551, %v1525, %v762
      %v1559 = vsel %vm1551, %v1526, %v764
      %v1560 = vsel %vm1551, %v1527, %v766
      %v1561 = vsel %vm1551, %v1528, %v768
      %v1562 = vsel %vm1551, %v1529, %v770
      %v1563 = vsel %vm1551, %v1530, %v772
      %v1564 = vsel %vm1551, %v1531, %v774
      %v1565 = vsel %vm1551, %v1532, %v776
      %v1566 = vsel %vm1551, %v1533, %v778
      %v1567 = vsel %vm1551, %v1534, %v780
      %v1568 = vsel %vm1551, %v1535, %v782
      %v1569 = vsel %vm1551, %v1536, %v784
      %v1570 = vsel %vm1551, %v1537, %v786
      %v1571 = vsel %vm1551, %v1538, %v788
      %v1572 = vsel %vm1551, %v1539, %v790
      %v1573 = vsel %vm1551, %v1540, %v792
      %v1574 = vsel %vm1551, %v1541, %v794
      %v1575 = vsel %vm1551, %v1542, %v796
      %v1576 = vsel %vm1551, %v1543, %v798
      %v1577 = vsel %vm1551, %v1544, %v800
      %v1578 = vsel %vm1551, %v1545, %v802
      %v1579 = vsel %vm1551, %v1546, %v804
      %v1580 = vsel %vm1551, %v1547, %v806
      %v1581 = vsel %vm1551, %v1548, %v808
      %v1582 = vsel %vm1551, %v1549, %v810
      %v1583 = vsel %vm1551, %v1550, %v812
      %vm1584 = vcmask 162816
      %v1585 = vsel %vm1584, %v1552, %v878
      %v1586 = vsel %vm1584, %v1553, %v880
      %v1587 = vsel %vm1584, %v1554, %v882
      %v1588 = vsel %vm1584, %v1555, %v884
      %v1589 = vsel %vm1584, %v1556, %v886
      %v1590 = vsel %vm1584, %v1557, %v888
      %v1591 = vsel %vm1584, %v1558, %v890
      %v1592 = vsel %vm1584, %v1559, %v892
      %v1593 = vsel %vm1584, %v1560, %v894
      %v1594 = vsel %vm1584, %v1561, %v896
      %v1595 = vsel %vm1584, %v1562, %v898
      %v1596 = vsel %vm1584, %v1563, %v900
      %v1597 = vsel %vm1584, %v1564, %v902
      %v1598 = vsel %vm1584, %v1565, %v904
      %v1599 = vsel %vm1584, %v1566, %v906
      %v1600 = vsel %vm1584, %v1567, %v908
      %v1601 = vsel %vm1584, %v1568, %v910
      %v1602 = vsel %vm1584, %v1569, %v912
      %v1603 = vsel %vm1584, %v1570, %v914
      %v1604 = vsel %vm1584, %v1571, %v916
      %v1605 = vsel %vm1584, %v1572, %v918
      %v1606 = vsel %vm1584, %v1573, %v920
      %v1607 = vsel %vm1584, %v1574, %v922
      %v1608 = vsel %vm1584, %v1575, %v924
      %v1609 = vsel %vm1584, %v1576, %v926
      %v1610 = vsel %vm1584, %v1577, %v928
      %v1611 = vsel %vm1584, %v1578, %v930
      %v1612 = vsel %vm1584, %v1579, %v932
      %v1613 = vsel %vm1584, %v1580, %v934
      %v1614 = vsel %vm1584, %v1581, %v936
      %v1615 = vsel %vm1584, %v1582, %v938
      %v1616 = vsel %vm1584, %v1583, %v940
      %vm1617 = vcmask 203776
      %v1618 = vsel %vm1617, %v1585, %v1006
      %v1619 = vsel %vm1617, %v1586, %v1008
      %v1620 = vsel %vm1617, %v1587, %v1010
      %v1621 = vsel %vm1617, %v1588, %v1012
      %v1622 = vsel %vm1617, %v1589, %v1014
      %v1623 = vsel %vm1617, %v1590, %v1016
      %v1624 = vsel %vm1617, %v1591, %v1018
      %v1625 = vsel %vm1617, %v1592, %v1020
      %v1626 = vsel %vm1617, %v1593, %v1022
      %v1627 = vsel %vm1617, %v1594, %v1024
      %v1628 = vsel %vm1617, %v1595, %v1026
      %v1629 = vsel %vm1617, %v1596, %v1028
      %v1630 = vsel %vm1617, %v1597, %v1030
      %v1631 = vsel %vm1617, %v1598, %v1032
      %v1632 = vsel %vm1617, %v1599, %v1034
      %v1633 = vsel %vm1617, %v1600, %v1036
      %v1634 = vsel %vm1617, %v1601, %v1038
      %v1635 = vsel %vm1617, %v1602, %v1040
      %v1636 = vsel %vm1617, %v1603, %v1042
      %v1637 = vsel %vm1617, %v1604, %v1044
      %v1638 = vsel %vm1617, %v1605, %v1046
      %v1639 = vsel %vm1617, %v1606, %v1048
      %v1640 = vsel %vm1617, %v1607, %v1050
      %v1641 = vsel %vm1617, %v1608, %v1052
      %v1642 = vsel %vm1617, %v1609, %v1054
      %v1643 = vsel %vm1617, %v1610, %v1056
      %v1644 = vsel %vm1617, %v1611, %v1058
      %v1645 = vsel %vm1617, %v1612, %v1060
      %v1646 = vsel %vm1617, %v1613, %v1062
      %v1647 = vsel %vm1617, %v1614, %v1064
      %v1648 = vsel %vm1617, %v1615, %v1066
      %v1649 = vsel %vm1617, %v1616, %v1068
      %vm1650 = vcmask 244736
      %v1651 = vsel %vm1650, %v1618, %v1134
      %v1652 = vsel %vm1650, %v1619, %v1136
      %v1653 = vsel %vm1650, %v1620, %v1138
      %v1654 = vsel %vm1650, %v1621, %v1140
      %v1655 = vsel %vm1650, %v1622, %v1142
      %v1656 = vsel %vm1650, %v1623, %v1144
      %v1657 = vsel %vm1650, %v1624, %v1146
      %v1658 = vsel %vm1650, %v1625, %v1148
      %v1659 = vsel %vm1650, %v1626, %v1150
      %v1660 = vsel %vm1650, %v1627, %v1152
      %v1661 = vsel %vm1650, %v1628, %v1154
      %v1662 = vsel %vm1650, %v1629, %v1156
      %v1663 = vsel %vm1650, %v1630, %v1158
      %v1664 = vsel %vm1650, %v1631, %v1160
      %v1665 = vsel %vm1650, %v1632, %v1162
      %v1666 = vsel %vm1650, %v1633, %v1164
      %v1667 = vsel %vm1650, %v1634, %v1166
      %v1668 = vsel %vm1650, %v1635, %v1168
      %v1669 = vsel %vm1650, %v1636, %v1170
      %v1670 = vsel %vm1650, %v1637, %v1172
      %v1671 = vsel %vm1650, %v1638, %v1174
      %v1672 = vsel %vm1650, %v1639, %v1176
      %v1673 = vsel %vm1650, %v1640, %v1178
      %v1674 = vsel %vm1650, %v1641, %v1180
      %v1675 = vsel %vm1650, %v1642, %v1182
      %v1676 = vsel %vm1650, %v1643, %v1184
      %v1677 = vsel %vm1650, %v1644, %v1186
      %v1678 = vsel %vm1650, %v1645, %v1188
      %v1679 = vsel %vm1650, %v1646, %v1190
      %v1680 = vsel %vm1650, %v1647, %v1192
      %v1681 = vsel %vm1650, %v1648, %v1194
      %v1682 = vsel %vm1650, %v1649, %v1196
      %vm1683 = vcmask 285696
      %v1684 = vsel %vm1683, %v1651, %v1262
      %v1685 = vsel %vm1683, %v1652, %v1264
      %v1686 = vsel %vm1683, %v1653, %v1266
      %v1687 = vsel %vm1683, %v1654, %v1268
      %v1688 = vsel %vm1683, %v1655, %v1270
      %v1689 = vsel %vm1683, %v1656, %v1272
      %v1690 = vsel %vm1683, %v1657, %v1274
      %v1691 = vsel %vm1683, %v1658, %v1276
      %v1692 = vsel %vm1683, %v1659, %v1278
      %v1693 = vsel %vm1683, %v1660, %v1280
      %v1694 = vsel %vm1683, %v1661, %v1282
      %v1695 = vsel %vm1683, %v1662, %v1284
      %v1696 = vsel %vm1683, %v1663, %v1286
      %v1697 = vsel %vm1683, %v1664, %v1288
      %v1698 = vsel %vm1683, %v1665, %v1290
      %v1699 = vsel %vm1683, %v1666, %v1292
      %v1700 = vsel %vm1683, %v1667, %v1294
      %v1701 = vsel %vm1683, %v1668, %v1296
      %v1702 = vsel %vm1683, %v1669, %v1298
      %v1703 = vsel %vm1683, %v1670, %v1300
      %v1704 = vsel %vm1683, %v1671, %v1302
      %v1705 = vsel %vm1683, %v1672, %v1304
      %v1706 = vsel %vm1683, %v1673, %v1306
      %v1707 = vsel %vm1683, %v1674, %v1308
      %v1708 = vsel %vm1683, %v1675, %v1310
      %v1709 = vsel %vm1683, %v1676, %v1312
      %v1710 = vsel %vm1683, %v1677, %v1314
      %v1711 = vsel %vm1683, %v1678, %v1316
      %v1712 = vsel %vm1683, %v1679, %v1318
      %v1713 = vsel %vm1683, %v1680, %v1320
      %v1714 = vsel %vm1683, %v1681, %v1322
      %v1715 = vsel %vm1683, %v1682, %v1324
      %vm1716 = vcmask 326656
      %v1717 = vsel %vm1716, %v1684, %v1390
      %v1718 = vsel %vm1716, %v1685, %v1392
      %v1719 = vsel %vm1716, %v1686, %v1394
      %v1720 = vsel %vm1716, %v1687, %v1396
      %v1721 = vsel %vm1716, %v1688, %v1398
      %v1722 = vsel %vm1716, %v1689, %v1400
      %v1723 = vsel %vm1716, %v1690, %v1402
      %v1724 = vsel %vm1716, %v1691, %v1404
      %v1725 = vsel %vm1716, %v1692, %v1406
      %v1726 = vsel %vm1716, %v1693, %v1408
      %v1727 = vsel %vm1716, %v1694, %v1410
      %v1728 = vsel %vm1716, %v1695, %v1412
      %v1729 = vsel %vm1716, %v1696, %v1414
      %v1730 = vsel %vm1716, %v1697, %v1416
      %v1731 = vsel %vm1716, %v1698, %v1418
      %v1732 = vsel %vm1716, %v1699, %v1420
      %v1733 = vsel %vm1716, %v1700, %v1422
      %v1734 = vsel %vm1716, %v1701, %v1424
      %v1735 = vsel %vm1716, %v1702, %v1426
      %v1736 = vsel %vm1716, %v1703, %v1428
      %v1737 = vsel %vm1716, %v1704, %v1430
      %v1738 = vsel %vm1716, %v1705, %v1432
      %v1739 = vsel %vm1716, %v1706, %v1434
      %v1740 = vsel %vm1716, %v1707, %v1436
      %v1741 = vsel %vm1716, %v1708, %v1438
      %v1742 = vsel %vm1716, %v1709, %v1440
      %v1743 = vsel %vm1716, %v1710, %v1442
      %v1744 = vsel %vm1716, %v1711, %v1444
      %v1745 = vsel %vm1716, %v1712, %v1446
      %v1746 = vsel %vm1716, %v1713, %v1448
      %v1747 = vsel %vm1716, %v1714, %v1450
      %v1748 = vsel %vm1716, %v1715, %v1452
      %v1749 = vld [vmem:[%s1] sm:$0xff]
      %v1750 = vld [vmem:[%s1 + $0x8] sm:$0xff]
      %v1751 = vld [vmem:[%s1 + $0x10] sm:$0xff]
      %v1752 = vld [vmem:[%s1 + $0x18] sm:$0xff]
      %v1753 = vld [vmem:[%s1 + $0x20] sm:$0xff]
      %v1754 = vld [vmem:[%s1 + $0x28] sm:$0x1f]
      %v1755 = vld [vmem:[%s2] sm:$0x1]
      %v1757 = vlaneseq
      %v1758 = vshrl.u32 %v1757, 7
      %v1759 = vsub.s32 0, %v1758
      %v1760 = vrot.slane %v1755, %v1759
      %vm1762 = vcmask 367616
      %v1764 = vsel %vm1762, %v1717, 0
      %v1767 = vsel %vm1762, %v1718, 0
      %v1770 = vsel %vm1762, %v1719, 0
      %v1773 = vsel %vm1762, %v1720, 0
      %v1776 = vsel %vm1762, %v1721, 0
      %v1779 = vsel %vm1762, %v1722, 0
      %v1782 = vsel %vm1762, %v1723, 0
      %v1785 = vsel %vm1762, %v1724, 0
      %v1788 = vsel %vm1762, %v1725, 0
      %v1791 = vsel %vm1762, %v1726, 0
      %v1794 = vsel %vm1762, %v1727, 0
      %v1797 = vsel %vm1762, %v1728, 0
      %v1800 = vsel %vm1762, %v1729, 0
      %v1803 = vsel %vm1762, %v1730, 0
      %v1806 = vsel %vm1762, %v1731, 0
      %v1809 = vsel %vm1762, %v1732, 0
      %v1812 = vsel %vm1762, %v1733, 0
      %v1815 = vsel %vm1762, %v1734, 0
      %v1818 = vsel %vm1762, %v1735, 0
      %v1821 = vsel %vm1762, %v1736, 0
      %v1824 = vsel %vm1762, %v1737, 0
      %v1827 = vsel %vm1762, %v1738, 0
      %v1830 = vsel %vm1762, %v1739, 0
      %v1833 = vsel %vm1762, %v1740, 0
      %v1836 = vsel %vm1762, %v1741, 0
      %v1839 = vsel %vm1762, %v1742, 0
      %v1842 = vsel %vm1762, %v1743, 0
      %v1845 = vsel %vm1762, %v1744, 0
      %v1848 = vsel %vm1762, %v1745, 0
      %v1851 = vsel %vm1762, %v1746, 0
      %v1854 = vsel %vm1762, %v1747, 0
      %v1857 = vsel %vm1762, %v1748, 0
      %vm1859 = vcmask 1044480
      %v1861 = vsel %vm1859, %v1754, 0
      %1863 = vmatprep.subr.mxu0 0.0
      %1864 = vmatpush1.msra.mxu0 %v1749
      %1865 = vmatprep.subr.mxu0 0.0
      %1866 = vmatpush1.msra.mxu0 %v1750
      %1867 = vmatprep.subr.mxu0 0.0
      %1868 = vmatpush1.msra.mxu0 %v1751
      %1869 = vmatprep.subr.mxu0 0.0
      %1870 = vmatpush1.msra.mxu0 %v1752
      %1871 = vmatprep.subr.mxu0 0.0
      %1872 = vmatpush1.msra.mxu0 %v1753
      %1873 = vmatprep.subr.mxu0 0.0
      %1874 = vmatpush1.msra.mxu0 %v1861
      %1875 = vmatprep.subr.mxu0 0.0
      %1876 = vmatpush1.msra.mxu0 0.0
      %1877 = vmatprep.subr.mxu0 0.0
      %1878 = vmatpush1.msra.mxu0 0.0
      %1879 = vmatprep.subr.mxu0 0.0
      %1880 = vmatpush1.msra.mxu0 0.0
      %1881 = vmatprep.subr.mxu0 0.0
      %1882 = vmatpush1.msra.mxu0 0.0
      %1883 = vmatprep.subr.mxu0 0.0
      %1884 = vmatpush1.msra.mxu0 0.0
      %1885 = vmatprep.subr.mxu0 0.0
      %1886 = vmatpush1.msra.mxu0 0.0
      %1887 = vmatprep.subr.mxu0 0.0
      %1888 = vmatpush1.msra.mxu0 0.0
      %1889 = vmatprep.subr.mxu0 0.0
      %1890 = vmatpush1.msra.mxu0 0.0
      %1891 = vmatprep.subr.mxu0 0.0
      %1892 = vmatpush1.msra.mxu0 0.0
      %1893 = vmatprep.subr.mxu0 0.0
      %1894 = vmatpush1.msra.mxu0 0.0
      %1895 = vmatprep.subr.mxu0 0.0
      %1896 = vmatpush1.msra.mxu0 0.0
      %1897 = vmatprep.subr.mxu0 0.0
      %1898 = vmatpush1.msra.mxu0 0.0
      %1899 = vmatprep.subr.mxu0 0.0
      %1900 = vmatpush1.msra.mxu0 0.0
      %1901 = vmatprep.subr.mxu0 0.0
      %1902 = vmatpush1.msra.mxu0 0.0
      %1903 = vmatprep.subr.mxu0 0.0
      %1904 = vmatpush1.msra.mxu0 0.0
      %1905 = vmatprep.subr.mxu0 0.0
      %1906 = vmatpush1.msra.mxu0 0.0
      %1907 = vmatprep.subr.mxu0 0.0
      %1908 = vmatpush1.msra.mxu0 0.0
      %1909 = vmatprep.subr.mxu0 0.0
      %1910 = vmatpush1.msra.mxu0 0.0
      %1911 = vmatprep.subr.mxu0 0.0
      %1912 = vmatpush1.msra.mxu0 0.0
      %1913 = vmatprep.subr.mxu0 0.0
      %1914 = vmatpush1.msra.mxu0 0.0
      %1915 = vmatprep.subr.mxu0 0.0
      %1916 = vmatpush1.msra.mxu0 0.0
      %1917 = vmatprep.subr.mxu0 0.0
      %1918 = vmatpush1.msra.mxu0 0.0
      %1919 = vmatprep.subr.mxu0 0.0
      %1920 = vmatpush1.msra.mxu0 0.0
      %1921 = vmatprep.subr.mxu0 0.0
      %1922 = vmatpush1.msra.mxu0 0.0
      %1923 = vmatprep.subr.mxu0 0.0
      %1924 = vmatpush1.msra.mxu0 0.0
      %1925 = vmatprep.subr.mxu0 0.0
      %1926 = vmatpush1.msra.mxu0 0.0
      %1927 = vmatprep.mubr.f32.mxu0 0.0
      %1928 = vmatmul.mubr.f32.gmra.mrb[0].mxu0 %v1764
      %v1929 = vpop.f32.mrb[0].mxu0
      %v1930 = vadd.f32 %v1760, %v1929
      %v1931 = vpop.f32.mrb[0].mxu0
      %1932 = vmatprep.mubr.f32.mxu0 0.0
      %1933 = vmatmul.mubr.f32.gmra.mrb[0].mxu0 %v1767
      %v1934 = vpop.f32.mrb[0].mxu0
      %v1935 = vadd.f32 %v1760, %v1934
      %v1936 = vpop.f32.mrb[0].mxu0
      %1937 = vmatprep.mubr.f32.mxu0 0.0
      %1938 = vmatmul.mubr.f32.gmra.mrb[0].mxu0 %v1770
      %v1939 = vpop.f32.mrb[0].mxu0
      %v1940 = vadd.f32 %v1760, %v1939
      %v1941 = vpop.f32.mrb[0].mxu0
      %1942 = vmatprep.mubr.f32.mxu0 0.0
      %1943 = vmatmul.mubr.f32.gmra.mrb[0].mxu0 %v1773
      %v1944 = vpop.f32.mrb[0].mxu0
      %v1945 = vadd.f32 %v1760, %v1944
      %v1946 = vpop.f32.mrb[0].mxu0
      %1947 = vmatprep.mubr.f32.mxu0 0.0
      %1948 = vmatmul.mubr.f32.gmra.mrb[0].mxu0 %v1776
      %v1949 = vpop.f32.mrb[0].mxu0
      %v1950 = vadd.f32 %v1760, %v1949
      %v1951 = vpop.f32.mrb[0].mxu0
      %1952 = vmatprep.mubr.f32.mxu0 0.0
      %1953 = vmatmul.mubr.f32.gmra.mrb[0].mxu0 %v1779
      %v1954 = vpop.f32.mrb[0].mxu0
      %v1955 = vadd.f32 %v1760, %v1954
      %v1956 = vpop.f32.mrb[0].mxu0
      %1957 = vmatprep.mubr.f32.mxu0 0.0
      %1958 = vmatmul.mubr.f32.gmra.mrb[0].mxu0 %v1782
      %v1959 = vpop.f32.mrb[0].mxu0
      %v1960 = vadd.f32 %v1760, %v1959
      %v1961 = vpop.f32.mrb[0].mxu0
      %1962 = vmatprep.mubr.f32.mxu0 0.0
      %1963 = vmatmul.mubr.f32.gmra.mrb[0].mxu0 %v1785
      %v1964 = vpop.f32.mrb[0].mxu0
      %v1965 = vadd.f32 %v1760, %v1964
      %v1966 = vpop.f32.mrb[0].mxu0
      %1967 = vmatprep.mubr.f32.mxu0 0.0
      %1968 = vmatmul.mubr.f32.gmra.mrb[0].mxu0 %v1788
      %v1969 = vpop.f32.mrb[0].mxu0
      %v1970 = vadd.f32 %v1760, %v1969
      %v1971 = vpop.f32.mrb[0].mxu0
      %1972 = vmatprep.mubr.f32.mxu0 0.0
      %1973 = vmatmul.mubr.f32.gmra.mrb[0].mxu0 %v1791
      %v1974 = vpop.f32.mrb[0].mxu0
      %v1975 = vadd.f32 %v1760, %v1974
      %v1976 = vpop.f32.mrb[0].mxu0
      %1977 = vmatprep.mubr.f32.mxu0 0.0
      %1978 = vmatmul.mubr.f32.gmra.mrb[0].mxu0 %v1794
      %v1979 = vpop.f32.mrb[0].mxu0
      %v1980 = vadd.f32 %v1760, %v1979
      %v1981 = vpop.f32.mrb[0].mxu0
      %1982 = vmatprep.mubr.f32.mxu0 0.0
      %1983 = vmatmul.mubr.f32.gmra.mrb[0].mxu0 %v1797
      %v1984 = vpop.f32.mrb[0].mxu0
      %v1985 = vadd.f32 %v1760, %v1984
      %v1986 = vpop.f32.mrb[0].mxu0
      %1987 = vmatprep.mubr.f32.mxu0 0.0
      %1988 = vmatmul.mubr.f32.gmra.mrb[0].mxu0 %v1800
      %v1989 = vpop.f32.mrb[0].mxu0
      %v1990 = vadd.f32 %v1760, %v1989
      %v1991 = vpop.f32.mrb[0].mxu0
      %1992 = vmatprep.mubr.f32.mxu0 0.0
      %1993 = vmatmul.mubr.f32.gmra.mrb[0].mxu0 %v1803
      %v1994 = vpop.f32.mrb[0].mxu0
      %v1995 = vadd.f32 %v1760, %v1994
      %v1996 = vpop.f32.mrb[0].mxu0
      %1997 = vmatprep.mubr.f32.mxu0 0.0
      %1998 = vmatmul.mubr.f32.gmra.mrb[0].mxu0 %v1806
      %v1999 = vpop.f32.mrb[0].mxu0
      %v2000 = vadd.f32 %v1760, %v1999
      %v2001 = vpop.f32.mrb[0].mxu0
      %2002 = vmatprep.mubr.f32.mxu0 0.0
      %2003 = vmatmul.mubr.f32.gmra.mrb[0].mxu0 %v1809
      %v2004 = vpop.f32.mrb[0].mxu0
      %v2005 = vadd.f32 %v1760, %v2004
      %v2006 = vpop.f32.mrb[0].mxu0
      %2007 = vmatprep.mubr.f32.mxu0 0.0
      %2008 = vmatmul.mubr.f32.gmra.mrb[0].mxu0 %v1812
      %v2009 = vpop.f32.mrb[0].mxu0
      %v2010 = vadd.f32 %v1760, %v2009
      %v2011 = vpop.f32.mrb[0].mxu0
      %2012 = vmatprep.mubr.f32.mxu0 0.0
      %2013 = vmatmul.mubr.f32.gmra.mrb[0].mxu0 %v1815
      %v2014 = vpop.f32.mrb[0].mxu0
      %v2015 = vadd.f32 %v1760, %v2014
      %v2016 = vpop.f32.mrb[0].mxu0
      %2017 = vmatprep.mubr.f32.mxu0 0.0
      %2018 = vmatmul.mubr.f32.gmra.mrb[0].mxu0 %v1818
      %v2019 = vpop.f32.mrb[0].mxu0
      %v2020 = vadd.f32 %v1760, %v2019
      %v2021 = vpop.f32.mrb[0].mxu0
      %2022 = vmatprep.mubr.f32.mxu0 0.0
      %2023 = vmatmul.mubr.f32.gmra.mrb[0].mxu0 %v1821
      %v2024 = vpop.f32.mrb[0].mxu0
      %v2025 = vadd.f32 %v1760, %v2024
      %v2026 = vpop.f32.mrb[0].mxu0
      %2027 = vmatprep.mubr.f32.mxu0 0.0
      %2028 = vmatmul.mubr.f32.gmra.mrb[0].mxu0 %v1824
      %v2029 = vpop.f32.mrb[0].mxu0
      %v2030 = vadd.f32 %v1760, %v2029
      %v2031 = vpop.f32.mrb[0].mxu0
      %2032 = vmatprep.mubr.f32.mxu0 0.0
      %2033 = vmatmul.mubr.f32.gmra.mrb[0].mxu0 %v1827
      %v2034 = vpop.f32.mrb[0].mxu0
      %v2035 = vadd.f32 %v1760, %v2034
      %v2036 = vpop.f32.mrb[0].mxu0
      %2037 = vmatprep.mubr.f32.mxu0 0.0
      %2038 = vmatmul.mubr.f32.gmra.mrb[0].mxu0 %v1830
      %v2039 = vpop.f32.mrb[0].mxu0
      %v2040 = vadd.f32 %v1760, %v2039
      %v2041 = vpop.f32.mrb[0].mxu0
      %2042 = vmatprep.mubr.f32.mxu0 0.0
      %2043 = vmatmul.mubr.f32.gmra.mrb[0].mxu0 %v1833
      %v2044 = vpop.f32.mrb[0].mxu0
      %v2045 = vadd.f32 %v1760, %v2044
      %v2046 = vpop.f32.mrb[0].mxu0
      %2047 = vmatprep.mubr.f32.mxu0 0.0
      %2048 = vmatmul.mubr.f32.gmra.mrb[0].mxu0 %v1836
      %v2049 = vpop.f32.mrb[0].mxu0
      %v2050 = vadd.f32 %v1760, %v2049
      %v2051 = vpop.f32.mrb[0].mxu0
      %2052 = vmatprep.mubr.f32.mxu0 0.0
      %2053 = vmatmul.mubr.f32.gmra.mrb[0].mxu0 %v1839
      %v2054 = vpop.f32.mrb[0].mxu0
      %v2055 = vadd.f32 %v1760, %v2054
      %v2056 = vpop.f32.mrb[0].mxu0
      %2057 = vmatprep.mubr.f32.mxu0 0.0
      %2058 = vmatmul.mubr.f32.gmra.mrb[0].mxu0 %v1842
      %v2059 = vpop.f32.mrb[0].mxu0
      %v2060 = vadd.f32 %v1760, %v2059
      %v2061 = vpop.f32.mrb[0].mxu0
      %2062 = vmatprep.mubr.f32.mxu0 0.0
      %2063 = vmatmul.mubr.f32.gmra.mrb[0].mxu0 %v1845
      %v2064 = vpop.f32.mrb[0].mxu0
      %v2065 = vadd.f32 %v1760, %v2064
      %v2066 = vpop.f32.mrb[0].mxu0
      %2067 = vmatprep.mubr.f32.mxu0 0.0
      %2068 = vmatmul.mubr.f32.gmra.mrb[0].mxu0 %v1848
      %v2069 = vpop.f32.mrb[0].mxu0
      %v2070 = vadd.f32 %v1760, %v2069
      %v2071 = vpop.f32.mrb[0].mxu0
      %2072 = vmatprep.mubr.f32.mxu0 0.0
      %2073 = vmatmul.mubr.f32.gmra.mrb[0].mxu0 %v1851
      %v2074 = vpop.f32.mrb[0].mxu0
      %v2075 = vadd.f32 %v1760, %v2074
      %v2076 = vpop.f32.mrb[0].mxu0
      %2077 = vmatprep.mubr.f32.mxu0 0.0
      %2078 = vmatmul.mubr.f32.gmra.mrb[0].mxu0 %v1854
      %v2079 = vpop.f32.mrb[0].mxu0
      %v2080 = vadd.f32 %v1760, %v2079
      %v2081 = vpop.f32.mrb[0].mxu0
      %2082 = vmatprep.mubr.f32.mxu0 0.0
      %2083 = vmatmul.mubr.f32.gmra.mrb[0].mxu0 %v1857
      %v2084 = vpop.f32.mrb[0].mxu0
      %v2085 = vadd.f32 %v1760, %v2084
      %v2086 = vpop.f32.mrb[0].mxu0
      %2087 = vdwg.mxu0
      %v2088 = vmax.f32 %v1930, 0.0
      %v2089 = vmax.f32 %v1935, 0.0
      %v2090 = vmax.f32 %v1940, 0.0
      %v2091 = vmax.f32 %v1945, 0.0
      %v2092 = vmax.f32 %v1950, 0.0
      %v2093 = vmax.f32 %v1955, 0.0
      %v2094 = vmax.f32 %v1960, 0.0
      %v2095 = vmax.f32 %v1965, 0.0
      %v2096 = vmax.f32 %v1970, 0.0
      %v2097 = vmax.f32 %v1975, 0.0
      %v2098 = vmax.f32 %v1980, 0.0
      %v2099 = vmax.f32 %v1985, 0.0
      %v2100 = vmax.f32 %v1990, 0.0
      %v2101 = vmax.f32 %v1995, 0.0
      %v2102 = vmax.f32 %v2000, 0.0
      %v2103 = vmax.f32 %v2005, 0.0
      %v2104 = vmax.f32 %v2010, 0.0
      %v2105 = vmax.f32 %v2015, 0.0
      %v2106 = vmax.f32 %v2020, 0.0
      %v2107 = vmax.f32 %v2025, 0.0
      %v2108 = vmax.f32 %v2030, 0.0
      %v2109 = vmax.f32 %v2035, 0.0
      %v2110 = vmax.f32 %v2040, 0.0
      %v2111 = vmax.f32 %v2045, 0.0
      %v2112 = vmax.f32 %v2050, 0.0
      %v2113 = vmax.f32 %v2055, 0.0
      %v2114 = vmax.f32 %v2060, 0.0
      %v2115 = vmax.f32 %v2065, 0.0
      %v2116 = vmax.f32 %v2070, 0.0
      %v2117 = vmax.f32 %v2075, 0.0
      %v2118 = vmax.f32 %v2080, 0.0
      %v2119 = vmax.f32 %v2085, 0.0
      %vm2120 = vcmask 261120
      %2121 = vst.msk [vmem:[%s170] sm:$0xff] %vm2120, %v2088
      %2122 = vst.msk [vmem:[%s170 + $0x8] sm:$0xff] %vm2120, %v2089
      %2123 = vst.msk [vmem:[%s170 + $0x10] sm:$0xff] %vm2120, %v2090
      %2124 = vst.msk [vmem:[%s170 + $0x18] sm:$0xff] %vm2120, %v2091
      %2125 = vst.msk [vmem:[%s170 + $0x20] sm:$0xff] %vm2120, %v2092
      %2126 = vst.msk [vmem:[%s170 + $0x28] sm:$0xff] %vm2120, %v2093
      %2127 = vst.msk [vmem:[%s170 + $0x30] sm:$0xff] %vm2120, %v2094
      %2128 = vst.msk [vmem:[%s170 + $0x38] sm:$0xff] %vm2120, %v2095
      %2129 = vst.msk [vmem:[%s170 + $0x40] sm:$0xff] %vm2120, %v2096
      %2130 = vst.msk [vmem:[%s170 + $0x48] sm:$0xff] %vm2120, %v2097
      %2131 = vst.msk [vmem:[%s170 + $0x50] sm:$0xff] %vm2120, %v2098
      %2132 = vst.msk [vmem:[%s170 + $0x58] sm:$0xff] %vm2120, %v2099
      %2133 = vst.msk [vmem:[%s170 + $0x60] sm:$0xff] %vm2120, %v2100
      %2134 = vst.msk [vmem:[%s170 + $0x68] sm:$0xff] %vm2120, %v2101
      %2135 = vst.msk [vmem:[%s170 + $0x70] sm:$0xff] %vm2120, %v2102
      %2136 = vst.msk [vmem:[%s170 + $0x78] sm:$0xff] %vm2120, %v2103
      %2137 = vst.msk [vmem:[%s170 + $0x80] sm:$0xff] %vm2120, %v2104
      %2138 = vst.msk [vmem:[%s170 + $0x88] sm:$0xff] %vm2120, %v2105
      %2139 = vst.msk [vmem:[%s170 + $0x90] sm:$0xff] %vm2120, %v2106
      %2140 = vst.msk [vmem:[%s170 + $0x98] sm:$0xff] %vm2120, %v2107
      %2141 = vst.msk [vmem:[%s170 + $0xa0] sm:$0xff] %vm2120, %v2108
      %2142 = vst.msk [vmem:[%s170 + $0xa8] sm:$0xff] %vm2120, %v2109
      %2143 = vst.msk [vmem:[%s170 + $0xb0] sm:$0xff] %vm2120, %v2110
      %2144 = vst.msk [vmem:[%s170 + $0xb8] sm:$0xff] %vm2120, %v2111
      %2145 = vst.msk [vmem:[%s170 + $0xc0] sm:$0xff] %vm2120, %v2112
      %2146 = vst.msk [vmem:[%s170 + $0xc8] sm:$0xff] %vm2120, %v2113
      %2147 = vst.msk [vmem:[%s170 + $0xd0] sm:$0xff] %vm2120, %v2114
      %2148 = vst.msk [vmem:[%s170 + $0xd8] sm:$0xff] %vm2120, %v2115
      %2149 = vst.msk [vmem:[%s170 + $0xe0] sm:$0xff] %vm2120, %v2116
      %2150 = vst.msk [vmem:[%s170 + $0xe8] sm:$0xff] %vm2120, %v2117
      %2151 = vst.msk [vmem:[%s170 + $0xf0] sm:$0xff] %vm2120, %v2118
      %2152 = vst.msk [vmem:[%s170 + $0xf8] sm:$0xff] %vm2120, %v2119
      %p2153 = scmp.lt.s32.totalorder %s14, 1
      %s2154 = scalar_select %p2153, %s14, 1
      %s2155 = smul.addr %s2154, 32
      %s2156 = smul.addr %s2155, 8
      %s2157 = scalar_lea.vmem %s3, %s2156
      // Predicated region
      $region33: #{tpu_custom_call.1} parent=31 // pred_check
        %p2158 = pneg %p100
      $region34: #{tpu_custom_call.1} parent=31 // pred_check_branch
        %2160 = sbr.rel (%p2158) target = $region36
      $region35: #{tpu_custom_call.1} parent=31 // pred_region
        _
      $region36: #{tpu_custom_call.1} parent=31 // pred_fallthru
        _
    $region32: #{tpu_custom_call.1} parent=5 // pred_fallthru
      _
    %p2161 = scmp.le.s32.totalorder 2, %s9
    // Predicated region
    $region37: #{tpu_custom_call.1} parent=5 // pred_check
      %p2162 = pneg %p2161
    $region38: #{tpu_custom_call.1} parent=5 // pred_check_branch
      %2164 = sbr.rel (%p2162) target = $region40
    $region39: #{tpu_custom_call.1} parent=5 // pred_region
      %s2165 = ssub.s32 %s9, 2
      // Predicated region
      $region41: #{tpu_custom_call.1} parent=39 // pred_check
        %p2166 = pneg %p106
      $region42: #{tpu_custom_call.1} parent=39 // pred_check_branch
        %2168 = sbr.rel (%p2166) target = $region44
      $region43: #{tpu_custom_call.1} parent=39 // pred_region
        %p2169 = scmp.lt.s32.totalorder %s15, 1
        %s2170 = scalar_select %p2169, %s15, 1
        %s2171 = smul.addr %s2170, 32
        %s2172 = smul.addr %s2171, 8
        %s2173 = scalar_lea.vmem %s3, %s2172
      $region44: #{tpu_custom_call.1} parent=39 // pred_fallthru
        _
    $region40: #{tpu_custom_call.1} parent=5 // pred_fallthru
      _
  $region6: #{tpu_custom_call.1} parent=0 // loop_footer
    %s13 = sadd.s32 1, %s9
  $region7: #{tpu_custom_call.1} parent=0 // loop_footer_branch
    %8 = sbr.rel target = $region3
  $region8: #{tpu_custom_call.1} parent=0 // loop_exit
    _

</llo_original>
